<compile_context>
chip_gen: v7x
topology: tpu7x:2x2x1
jax: 0.10.0
libtpu: 0.0.40
codegen_flags: <defaults>
</compile_context>

<pallas_src>
import functools

import jax
import jax.numpy as jnp
from jax.experimental import pallas as pl
from jax.experimental.pallas import tpu as pltpu

EPS = 0.1    # LayerNorm eps from the module
LANE = 128


def encoder_kernel(xT_ref, w1_ref, wstk_ref, b_ref, g_ref, be_ref,
                   wh_ref, bh_ref, out_ref):
    # xT_ref: (D_in, tile_b) f32, batch on lanes.
    xT = xT_ref[...].astype(jnp.float32)

    # PyTorch: norm = x.pow(2).sum(-1).sqrt(); x = x / norm[:, None]
    # here each original row is a lane column -> reduce over the feature axis.
    xT = xT * jax.lax.rsqrt(jnp.sum(xT * xT, axis=0, keepdims=True))
    # F.dropout(..., training=False) -> identity (eval-mode semantics)

    def matmul(w_bf16, h_f32):
        # bf16 operands, f32 accumulation on the MXU
        return jnp.dot(w_bf16, h_f32.astype(jnp.bfloat16),
                       preferred_element_type=jnp.float32)

    def block(pre, k):
        # pre = W_k h + residual ; add bias, swish, LayerNorm(eps=0.1)
        h = pre + b_ref[:, k:k + 1]
        h = h * jax.nn.sigmoid(h)                       # swish
        m = jnp.mean(h, axis=0, keepdims=True)          # reduce over H (sublanes)
        # independent reductions (E[h^2], E[h]) -> can overlap on the XLU
        v = jnp.mean(h * h, axis=0, keepdims=True) - m * m
        return ((h - m) * jax.lax.rsqrt(v + EPS) * g_ref[:, k:k + 1]
                + be_ref[:, k:k + 1])

    h = block(matmul(w1_ref[...], xT), 0)               # h1
    res = h                                             # running residual sum
    for k in range(4):                                  # h2 .. h5
        # per-layer weight load: no (4,H,H) stack held live across layers
        h = block(matmul(wstk_ref[k], h) + res, k + 1)
        res = res + h

    # fused mu/logvar head: one matmul, one lane-dense (2L, tile_b) store
    out_ref[...] = (matmul(wh_ref[...], h) + bh_ref[...]).astype(out_ref.dtype)


def _round_up(n, m):
    return ((n + m - 1) // m) * m


def _tensorcores_per_chip():
    # v7x has 2 TensorCores per chip; v5e / v6e have 1 (grid = serial loop).
    try:
        kind = jax.devices()[0].device_kind.lower()
    except Exception:
        return 1
    return 2 if "7" in kind else 1


def _choose_tile_b(B, max_tile=512):
    # Batch lives on lanes -> tile_b must be a multiple of 128.
    # Single-TC chips: prefer one big step (grid steps cost ~0.35us each).
    # v7x: prefer >= 2 "parallel" steps when the batch is large enough.
    steps = _tensorcores_per_chip()
    tile = _round_up(pl.cdiv(B, steps), LANE)
    return max(LANE, min(max_tile, tile))


@functools.partial(jax.jit, static_argnames=("max_tile",))
def encoder_forward(x, params, max_tile=512):
    B, D_in = x.shape
    H = params["w1"].shape[0]
    L = params["wmu"].shape[0]

    # ---- pack parameters: weights bf16, bias / LN params f32 ----------------
    w1 = params["w1"].astype(jnp.bfloat16)                                    # (H, D_in)
    wstk = jnp.stack([params[f"w{i}"] for i in range(2, 6)]
                     ).astype(jnp.bfloat16)                                   # (4, H, H)
    b_all = jnp.stack([params[f"b{i}"] for i in range(1, 6)], axis=1)         # (H, 5)
    g_all = jnp.stack([params[f"g{i}"] for i in range(1, 6)], axis=1)         # (H, 5)
    be_all = jnp.stack([params[f"be{i}"] for i in range(1, 6)], axis=1)       # (H, 5)
    wh = jnp.concatenate([params["wmu"], params["wlv"]], axis=0
                         ).astype(jnp.bfloat16)                               # (2L, H)
    bh = jnp.concatenate([params["bmu"], params["blv"]], axis=0)[:, None]     # (2L, 1)

    # ---- batch on lanes: transpose x, pad batch to a tile multiple ----------
    tile_b = _choose_tile_b(B, max_tile=max_tile)
    padded_b = _round_up(B, tile_b)
    xT = x.T                                                                  # (D_in, B)
    if padded_b != B:
        # pad columns filled with ones so their row-norm stays finite
        xT = jnp.concatenate(
            [xT, jnp.ones((D_in, padded_b - B), xT.dtype)], axis=1)
    grid = padded_b // tile_b

    def full(shape):
        nd = len(shape)
        return pl.BlockSpec(shape, lambda i, _nd=nd: (0,) * _nd)

    in_specs = [
        pl.BlockSpec((D_in, tile_b), lambda i: (0, i)),    # xT, tiled over batch
        full(w1.shape), full(wstk.shape),
        full(b_all.shape), full(g_all.shape), full(be_all.shape),
        full(wh.shape), full(bh.shape),
    ]
    out_specs = pl.BlockSpec((2 * L, tile_b), lambda i: (0, i))
    out_shape = jax.ShapeDtypeStruct((2 * L, padded_b), jnp.float32)

    # ---- VMEM budget (double-buffered blocks + slack) ------------------------
    def nbytes(a):
        return a.size * a.dtype.itemsize

    block_bytes = (D_in * tile_b * 4
                   + nbytes(w1) + nbytes(wstk)
                   + nbytes(b_all) + nbytes(g_all) + nbytes(be_all)
                   + nbytes(wh) + nbytes(bh)
                   + 2 * L * tile_b * 4)
    vmem_limit = int(min(48 << 20, max(32 << 20, 4 * block_bytes)))

    flops = 2 * padded_b * (D_in * H + 4 * H * H + H * 2 * L)
    transcendentals = padded_b * (5 * H + 12)      # sigmoids + rsqrts
    bytes_accessed = (xT.size * 4 + nbytes(w1) + nbytes(wstk)
                      + nbytes(b_all) + nbytes(g_all) + nbytes(be_all)
                      + nbytes(wh) + nbytes(bh) + padded_b * 2 * L * 4)

    out = pl.pallas_call(
        encoder_kernel,
        out_shape=out_shape,
        grid_spec=pltpu.PrefetchScalarGridSpec(
            num_scalar_prefetch=0,
            grid=(grid,),
            in_specs=in_specs,
            out_specs=out_specs,
        ),
        compiler_params=pltpu.CompilerParams(
            dimension_semantics=("parallel",),
            vmem_limit_bytes=vmem_limit),
        cost_estimate=pl.CostEstimate(
            flops=flops,
            transcendentals=transcendentals,
            bytes_accessed=bytes_accessed),
    )(xT, w1, wstk, b_all, g_all, be_all, wh, bh)

    mu = out[:L, :B].T
    logvar = out[L:, :B].T
    return mu, logvar


def init_params(key, input_dim, hidden_dim, latent_dim):
    """PyTorch-style init; Linear weights kept in PyTorch (out, in) orientation."""
    params = {}

    def linear(key, fan_in, fan_out):
        kw, kb = jax.random.split(key)
        bound = 1.0 / jnp.sqrt(fan_in)
        w = jax.random.uniform(kw, (fan_out, fan_in), jnp.float32, -bound, bound)
        b = jax.random.uniform(kb, (fan_out,), jnp.float32, -bound, bound)
        return w, b

    keys = jax.random.split(key, 7)
    dims_in = [input_dim] + [hidden_dim] * 4
    for i, (k, d_in) in enumerate(zip(keys[:5], dims_in), start=1):
        w, b = linear(k, d_in, hidden_dim)
        params[f"w{i}"] = w
        params[f"b{i}"] = b
        params[f"g{i}"] = jnp.ones((hidden_dim,), jnp.float32)
        params[f"be{i}"] = jnp.zeros((hidden_dim,), jnp.float32)
    params["wmu"], params["bmu"] = linear(keys[5], hidden_dim, latent_dim)
    params["wlv"], params["blv"] = linear(keys[6], hidden_dim, latent_dim)
    return params


def encoder_reference(x, params):
    """Pure-JAX f32 reference (eval-mode dropout), PyTorch semantics."""
    x = x / jnp.sqrt(jnp.sum(x * x, axis=-1, keepdims=True))

    def lin(h, w, b):
        return h @ w.T + b

    def ln(h, g, b):
        mu = jnp.mean(h, axis=-1, keepdims=True)
        var = jnp.mean((h - mu) ** 2, axis=-1, keepdims=True)
        return (h - mu) / jnp.sqrt(var + EPS) * g + b

    def sw(h):
        return h * jax.nn.sigmoid(h)

    p = params
    h1 = ln(sw(lin(x, p["w1"], p["b1"])), p["g1"], p["be1"])
    h2 = ln(sw(lin(h1, p["w2"], p["b2"]) + h1), p["g2"], p["be2"])
    h3 = ln(sw(lin(h2, p["w3"], p["b3"]) + h1 + h2), p["g3"], p["be3"])
    h4 = ln(sw(lin(h3, p["w4"], p["b4"]) + h1 + h2 + h3), p["g4"], p["be4"])
    h5 = ln(sw(lin(h4, p["w5"], p["b5"]) + h1 + h2 + h3 + h4), p["g5"], p["be5"])
    return lin(h5, p["wmu"], p["bmu"]), lin(h5, p["wlv"], p["blv"])


if __name__ == "__main__":
    # batch intentionally not a lane multiple to exercise the padding path.
    batch, input_dim, hidden_dim, latent_dim = 20, 64, 32, 16

    key = jax.random.PRNGKey(0)
    kx, kp = jax.random.split(key)
    x = jax.random.normal(kx, (batch, input_dim), jnp.float32)
    params = init_params(kp, input_dim, hidden_dim, latent_dim)

    mu, logvar = encoder_forward(x, params)
    jax.block_until_ready((mu, logvar))

    mu_ref, lv_ref = encoder_reference(x, params)
    # kernel uses bf16 matmul operands with f32 accumulation -> relaxed tol
    assert mu.shape == mu_ref.shape and logvar.shape == lv_ref.shape
    assert jnp.allclose(mu, mu_ref, atol=5e-2, rtol=5e-2), "mu mismatch"
    assert jnp.allclose(logvar, lv_ref, atol=5e-2, rtol=5e-2), "logvar mismatch"

    print("KERNEL_OK")
</pallas_src>

<mosaic_0001>
module attributes {stable_mosaic.version = 11 : i64} {
  func.func @encoder_kernel(%arg0: i32, %arg1: memref<64x128xf32, #tpu.memory_space<vmem>>, %arg2: memref<32x64xbf16, #tpu.memory_space<vmem>>, %arg3: memref<4x32x32xbf16, #tpu.memory_space<vmem>>, %arg4: memref<32x5xf32, #tpu.memory_space<vmem>>, %arg5: memref<32x5xf32, #tpu.memory_space<vmem>>, %arg6: memref<32x5xf32, #tpu.memory_space<vmem>>, %arg7: memref<32x32xbf16, #tpu.memory_space<vmem>>, %arg8: memref<32x1xf32, #tpu.memory_space<vmem>>, %arg9: memref<32x128xf32, #tpu.memory_space<vmem>>) attributes {dimension_semantics = [#tpu.dimension_semantics<parallel>], iteration_bounds = array<i64: 1>, scalar_prefetch = 0 : i64, scratch_operands = 0 : i64, tpu.core_type = #tpu.core_type<tc>, window_params = [{transform_indices = @transform_0, window_bounds = array<i64: 64, 128>}, {pipeline_mode = #tpu.pipeline_mode<synchronous>, transform_indices = @transform_1, window_bounds = array<i64: 32, 64>}, {pipeline_mode = #tpu.pipeline_mode<synchronous>, transform_indices = @transform_2, window_bounds = array<i64: 4, 32, 32>}, {pipeline_mode = #tpu.pipeline_mode<synchronous>, transform_indices = @transform_3, window_bounds = array<i64: 32, 5>}, {pipeline_mode = #tpu.pipeline_mode<synchronous>, transform_indices = @transform_4, window_bounds = array<i64: 32, 5>}, {pipeline_mode = #tpu.pipeline_mode<synchronous>, transform_indices = @transform_5, window_bounds = array<i64: 32, 5>}, {pipeline_mode = #tpu.pipeline_mode<synchronous>, transform_indices = @transform_6, window_bounds = array<i64: 32, 32>}, {pipeline_mode = #tpu.pipeline_mode<synchronous>, transform_indices = @transform_7, window_bounds = array<i64: 32, 1>}, {transform_indices = @transform_8, window_bounds = array<i64: 32, 128>}]} {
    %c0 = arith.constant 0 : index
    %c0_0 = arith.constant 0 : index
    %0 = vector.load %arg1[%c0, %c0_0] : memref<64x128xf32, #tpu.memory_space<vmem>>, vector<64x128xf32>
    %1 = arith.mulf %0, %0 : vector<64x128xf32>
    %cst = arith.constant dense<0.000000e+00> : vector<128xf32>
    %2 = vector.multi_reduction <add>, %1, %cst [0] : vector<64x128xf32> to vector<128xf32>
    %3 = vector.shape_cast %2 : vector<128xf32> to vector<1x128xf32>
    %4 = math.rsqrt %3 : vector<1x128xf32>
    %5 = vector.broadcast %4 : vector<1x128xf32> to vector<64x128xf32>
    %6 = arith.mulf %0, %5 : vector<64x128xf32>
    %c0_1 = arith.constant 0 : index
    %c0_2 = arith.constant 0 : index
    %7 = vector.load %arg2[%c0_1, %c0_2] : memref<32x64xbf16, #tpu.memory_space<vmem>>, vector<32x64xbf16>
    %8 = arith.truncf %6 : vector<64x128xf32> to vector<64x128xbf16>
    %cst_3 = arith.constant dense<0.000000e+00> : vector<32x128xf32>
    %9 = tpu.matmul %7, %8, %cst_3 {dimension_numbers = #tpu.dot_dimension_numbers<[1], [0], [0], [1], [0, 0, 1, 1], [], []>} : vector<32x64xbf16>, vector<64x128xbf16>, vector<32x128xf32> -> vector<32x128xf32>
    %c0_4 = arith.constant 0 : index
    %c0_5 = arith.constant 0 : index
    %10 = vector.load %arg4[%c0_4, %c0_5] : memref<32x5xf32, #tpu.memory_space<vmem>>, vector<32x1xf32>
    %11 = vector.broadcast %10 : vector<32x1xf32> to vector<32x128xf32>
    %12 = arith.addf %9, %11 : vector<32x128xf32>
    %13 = arith.negf %12 : vector<32x128xf32>
    %14 = math.exp %13 : vector<32x128xf32>
    %cst_6 = arith.constant 1.000000e+00 : f32
    %15 = vector.broadcast %cst_6 : f32 to vector<32x128xf32>
    %16 = arith.addf %15, %14 : vector<32x128xf32>
    %17 = arith.divf %15, %16 : vector<32x128xf32>
    %18 = arith.mulf %12, %17 : vector<32x128xf32>
    %cst_7 = arith.constant dense<0.000000e+00> : vector<128xf32>
    %19 = vector.multi_reduction <add>, %18, %cst_7 [0] : vector<32x128xf32> to vector<128xf32>
    %20 = vector.shape_cast %19 : vector<128xf32> to vector<1x128xf32>
    %cst_8 = arith.constant 3.200000e+01 : f32
    %21 = vector.broadcast %cst_8 : f32 to vector<1x128xf32>
    %22 = arith.divf %20, %21 : vector<1x128xf32>
    %23 = arith.mulf %18, %18 : vector<32x128xf32>
    %cst_9 = arith.constant dense<0.000000e+00> : vector<128xf32>
    %24 = vector.multi_reduction <add>, %23, %cst_9 [0] : vector<32x128xf32> to vector<128xf32>
    %25 = vector.shape_cast %24 : vector<128xf32> to vector<1x128xf32>
    %cst_10 = arith.constant 3.200000e+01 : f32
    %26 = vector.broadcast %cst_10 : f32 to vector<1x128xf32>
    %27 = arith.divf %25, %26 : vector<1x128xf32>
    %28 = arith.mulf %22, %22 : vector<1x128xf32>
    %29 = arith.subf %27, %28 : vector<1x128xf32>
    %30 = vector.broadcast %22 : vector<1x128xf32> to vector<32x128xf32>
    %31 = arith.subf %18, %30 : vector<32x128xf32>
    %cst_11 = arith.constant 1.000000e-01 : f32
    %32 = vector.broadcast %cst_11 : f32 to vector<1x128xf32>
    %33 = arith.addf %29, %32 : vector<1x128xf32>
    %34 = math.rsqrt %33 : vector<1x128xf32>
    %35 = vector.broadcast %34 : vector<1x128xf32> to vector<32x128xf32>
    %36 = arith.mulf %31, %35 : vector<32x128xf32>
    %c0_12 = arith.constant 0 : index
    %c0_13 = arith.constant 0 : index
    %37 = vector.load %arg5[%c0_12, %c0_13] : memref<32x5xf32, #tpu.memory_space<vmem>>, vector<32x1xf32>
    %38 = vector.broadcast %37 : vector<32x1xf32> to vector<32x128xf32>
    %39 = arith.mulf %36, %38 : vector<32x128xf32>
    %c0_14 = arith.constant 0 : index
    %c0_15 = arith.constant 0 : index
    %40 = vector.load %arg6[%c0_14, %c0_15] : memref<32x5xf32, #tpu.memory_space<vmem>>, vector<32x1xf32>
    %41 = vector.broadcast %40 : vector<32x1xf32> to vector<32x128xf32>
    %42 = arith.addf %39, %41 : vector<32x128xf32>
    %c0_16 = arith.constant 0 : index
    %c0_17 = arith.constant 0 : index
    %c0_18 = arith.constant 0 : index
    %43 = vector.load %arg3[%c0_16, %c0_17, %c0_18] : memref<4x32x32xbf16, #tpu.memory_space<vmem>>, vector<1x32x32xbf16>
    %44 = vector.shape_cast %43 : vector<1x32x32xbf16> to vector<32x32xbf16>
    %45 = arith.truncf %42 : vector<32x128xf32> to vector<32x128xbf16>
    %cst_19 = arith.constant dense<0.000000e+00> : vector<32x128xf32>
    %46 = tpu.matmul %44, %45, %cst_19 {dimension_numbers = #tpu.dot_dimension_numbers<[1], [0], [0], [1], [0, 0, 1, 1], [], []>} : vector<32x32xbf16>, vector<32x128xbf16>, vector<32x128xf32> -> vector<32x128xf32>
    %47 = arith.addf %46, %42 : vector<32x128xf32>
    %c0_20 = arith.constant 0 : index
    %c1 = arith.constant 1 : index
    %48 = vector.load %arg4[%c0_20, %c1] : memref<32x5xf32, #tpu.memory_space<vmem>>, vector<32x1xf32>
    %49 = vector.broadcast %48 : vector<32x1xf32> to vector<32x128xf32>
    %50 = arith.addf %47, %49 : vector<32x128xf32>
    %51 = arith.negf %50 : vector<32x128xf32>
    %52 = math.exp %51 : vector<32x128xf32>
    %cst_21 = arith.constant 1.000000e+00 : f32
    %53 = vector.broadcast %cst_21 : f32 to vector<32x128xf32>
    %54 = arith.addf %53, %52 : vector<32x128xf32>
    %55 = arith.divf %53, %54 : vector<32x128xf32>
    %56 = arith.mulf %50, %55 : vector<32x128xf32>
    %cst_22 = arith.constant dense<0.000000e+00> : vector<128xf32>
    %57 = vector.multi_reduction <add>, %56, %cst_22 [0] : vector<32x128xf32> to vector<128xf32>
    %58 = vector.shape_cast %57 : vector<128xf32> to vector<1x128xf32>
    %cst_23 = arith.constant 3.200000e+01 : f32
    %59 = vector.broadcast %cst_23 : f32 to vector<1x128xf32>
    %60 = arith.divf %58, %59 : vector<1x128xf32>
    %61 = arith.mulf %56, %56 : vector<32x128xf32>
    %cst_24 = arith.constant dense<0.000000e+00> : vector<128xf32>
    %62 = vector.multi_reduction <add>, %61, %cst_24 [0] : vector<32x128xf32> to vector<128xf32>
    %63 = vector.shape_cast %62 : vector<128xf32> to vector<1x128xf32>
    %cst_25 = arith.constant 3.200000e+01 : f32
    %64 = vector.broadcast %cst_25 : f32 to vector<1x128xf32>
    %65 = arith.divf %63, %64 : vector<1x128xf32>
    %66 = arith.mulf %60, %60 : vector<1x128xf32>
    %67 = arith.subf %65, %66 : vector<1x128xf32>
    %68 = vector.broadcast %60 : vector<1x128xf32> to vector<32x128xf32>
    %69 = arith.subf %56, %68 : vector<32x128xf32>
    %cst_26 = arith.constant 1.000000e-01 : f32
    %70 = vector.broadcast %cst_26 : f32 to vector<1x128xf32>
    %71 = arith.addf %67, %70 : vector<1x128xf32>
    %72 = math.rsqrt %71 : vector<1x128xf32>
    %73 = vector.broadcast %72 : vector<1x128xf32> to vector<32x128xf32>
    %74 = arith.mulf %69, %73 : vector<32x128xf32>
    %c0_27 = arith.constant 0 : index
    %c1_28 = arith.constant 1 : index
    %75 = vector.load %arg5[%c0_27, %c1_28] : memref<32x5xf32, #tpu.memory_space<vmem>>, vector<32x1xf32>
    %76 = vector.broadcast %75 : vector<32x1xf32> to vector<32x128xf32>
    %77 = arith.mulf %74, %76 : vector<32x128xf32>
    %c0_29 = arith.constant 0 : index
    %c1_30 = arith.constant 1 : index
    %78 = vector.load %arg6[%c0_29, %c1_30] : memref<32x5xf32, #tpu.memory_space<vmem>>, vector<32x1xf32>
    %79 = vector.broadcast %78 : vector<32x1xf32> to vector<32x128xf32>
    %80 = arith.addf %77, %79 : vector<32x128xf32>
    %81 = arith.addf %42, %80 : vector<32x128xf32>
    %c1_31 = arith.constant 1 : index
    %c0_32 = arith.constant 0 : index
    %c0_33 = arith.constant 0 : index
    %82 = vector.load %arg3[%c1_31, %c0_32, %c0_33] : memref<4x32x32xbf16, #tpu.memory_space<vmem>>, vector<1x32x32xbf16>
    %83 = vector.shape_cast %82 : vector<1x32x32xbf16> to vector<32x32xbf16>
    %84 = arith.truncf %80 : vector<32x128xf32> to vector<32x128xbf16>
    %cst_34 = arith.constant dense<0.000000e+00> : vector<32x128xf32>
    %85 = tpu.matmul %83, %84, %cst_34 {dimension_numbers = #tpu.dot_dimension_numbers<[1], [0], [0], [1], [0, 0, 1, 1], [], []>} : vector<32x32xbf16>, vector<32x128xbf16>, vector<32x128xf32> -> vector<32x128xf32>
    %86 = arith.addf %85, %81 : vector<32x128xf32>
    %c0_35 = arith.constant 0 : index
    %c2 = arith.constant 2 : index
    %87 = vector.load %arg4[%c0_35, %c2] : memref<32x5xf32, #tpu.memory_space<vmem>>, vector<32x1xf32>
    %88 = vector.broadcast %87 : vector<32x1xf32> to vector<32x128xf32>
    %89 = arith.addf %86, %88 : vector<32x128xf32>
    %90 = arith.negf %89 : vector<32x128xf32>
    %91 = math.exp %90 : vector<32x128xf32>
    %cst_36 = arith.constant 1.000000e+00 : f32
    %92 = vector.broadcast %cst_36 : f32 to vector<32x128xf32>
    %93 = arith.addf %92, %91 : vector<32x128xf32>
    %94 = arith.divf %92, %93 : vector<32x128xf32>
    %95 = arith.mulf %89, %94 : vector<32x128xf32>
    %cst_37 = arith.constant dense<0.000000e+00> : vector<128xf32>
    %96 = vector.multi_reduction <add>, %95, %cst_37 [0] : vector<32x128xf32> to vector<128xf32>
    %97 = vector.shape_cast %96 : vector<128xf32> to vector<1x128xf32>
    %cst_38 = arith.constant 3.200000e+01 : f32
    %98 = vector.broadcast %cst_38 : f32 to vector<1x128xf32>
    %99 = arith.divf %97, %98 : vector<1x128xf32>
    %100 = arith.mulf %95, %95 : vector<32x128xf32>
    %cst_39 = arith.constant dense<0.000000e+00> : vector<128xf32>
    %101 = vector.multi_reduction <add>, %100, %cst_39 [0] : vector<32x128xf32> to vector<128xf32>
    %102 = vector.shape_cast %101 : vector<128xf32> to vector<1x128xf32>
    %cst_40 = arith.constant 3.200000e+01 : f32
    %103 = vector.broadcast %cst_40 : f32 to vector<1x128xf32>
    %104 = arith.divf %102, %103 : vector<1x128xf32>
    %105 = arith.mulf %99, %99 : vector<1x128xf32>
    %106 = arith.subf %104, %105 : vector<1x128xf32>
    %107 = vector.broadcast %99 : vector<1x128xf32> to vector<32x128xf32>
    %108 = arith.subf %95, %107 : vector<32x128xf32>
    %cst_41 = arith.constant 1.000000e-01 : f32
    %109 = vector.broadcast %cst_41 : f32 to vector<1x128xf32>
    %110 = arith.addf %106, %109 : vector<1x128xf32>
    %111 = math.rsqrt %110 : vector<1x128xf32>
    %112 = vector.broadcast %111 : vector<1x128xf32> to vector<32x128xf32>
    %113 = arith.mulf %108, %112 : vector<32x128xf32>
    %c0_42 = arith.constant 0 : index
    %c2_43 = arith.constant 2 : index
    %114 = vector.load %arg5[%c0_42, %c2_43] : memref<32x5xf32, #tpu.memory_space<vmem>>, vector<32x1xf32>
    %115 = vector.broadcast %114 : vector<32x1xf32> to vector<32x128xf32>
    %116 = arith.mulf %113, %115 : vector<32x128xf32>
    %c0_44 = arith.constant 0 : index
    %c2_45 = arith.constant 2 : index
    %117 = vector.load %arg6[%c0_44, %c2_45] : memref<32x5xf32, #tpu.memory_space<vmem>>, vector<32x1xf32>
    %118 = vector.broadcast %117 : vector<32x1xf32> to vector<32x128xf32>
    %119 = arith.addf %116, %118 : vector<32x128xf32>
    %120 = arith.addf %81, %119 : vector<32x128xf32>
    %c2_46 = arith.constant 2 : index
    %c0_47 = arith.constant 0 : index
    %c0_48 = arith.constant 0 : index
    %121 = vector.load %arg3[%c2_46, %c0_47, %c0_48] : memref<4x32x32xbf16, #tpu.memory_space<vmem>>, vector<1x32x32xbf16>
    %122 = vector.shape_cast %121 : vector<1x32x32xbf16> to vector<32x32xbf16>
    %123 = arith.truncf %119 : vector<32x128xf32> to vector<32x128xbf16>
    %cst_49 = arith.constant dense<0.000000e+00> : vector<32x128xf32>
    %124 = tpu.matmul %122, %123, %cst_49 {dimension_numbers = #tpu.dot_dimension_numbers<[1], [0], [0], [1], [0, 0, 1, 1], [], []>} : vector<32x32xbf16>, vector<32x128xbf16>, vector<32x128xf32> -> vector<32x128xf32>
    %125 = arith.addf %124, %120 : vector<32x128xf32>
    %c0_50 = arith.constant 0 : index
    %c3 = arith.constant 3 : index
    %126 = vector.load %arg4[%c0_50, %c3] : memref<32x5xf32, #tpu.memory_space<vmem>>, vector<32x1xf32>
    %127 = vector.broadcast %126 : vector<32x1xf32> to vector<32x128xf32>
    %128 = arith.addf %125, %127 : vector<32x128xf32>
    %129 = arith.negf %128 : vector<32x128xf32>
    %130 = math.exp %129 : vector<32x128xf32>
    %cst_51 = arith.constant 1.000000e+00 : f32
    %131 = vector.broadcast %cst_51 : f32 to vector<32x128xf32>
    %132 = arith.addf %131, %130 : vector<32x128xf32>
    %133 = arith.divf %131, %132 : vector<32x128xf32>
    %134 = arith.mulf %128, %133 : vector<32x128xf32>
    %cst_52 = arith.constant dense<0.000000e+00> : vector<128xf32>
    %135 = vector.multi_reduction <add>, %134, %cst_52 [0] : vector<32x128xf32> to vector<128xf32>
    %136 = vector.shape_cast %135 : vector<128xf32> to vector<1x128xf32>
    %cst_53 = arith.constant 3.200000e+01 : f32
    %137 = vector.broadcast %cst_53 : f32 to vector<1x128xf32>
    %138 = arith.divf %136, %137 : vector<1x128xf32>
    %139 = arith.mulf %134, %134 : vector<32x128xf32>
    %cst_54 = arith.constant dense<0.000000e+00> : vector<128xf32>
    %140 = vector.multi_reduction <add>, %139, %cst_54 [0] : vector<32x128xf32> to vector<128xf32>
    %141 = vector.shape_cast %140 : vector<128xf32> to vector<1x128xf32>
    %cst_55 = arith.constant 3.200000e+01 : f32
    %142 = vector.broadcast %cst_55 : f32 to vector<1x128xf32>
    %143 = arith.divf %141, %142 : vector<1x128xf32>
    %144 = arith.mulf %138, %138 : vector<1x128xf32>
    %145 = arith.subf %143, %144 : vector<1x128xf32>
    %146 = vector.broadcast %138 : vector<1x128xf32> to vector<32x128xf32>
    %147 = arith.subf %134, %146 : vector<32x128xf32>
    %cst_56 = arith.constant 1.000000e-01 : f32
    %148 = vector.broadcast %cst_56 : f32 to vector<1x128xf32>
    %149 = arith.addf %145, %148 : vector<1x128xf32>
    %150 = math.rsqrt %149 : vector<1x128xf32>
    %151 = vector.broadcast %150 : vector<1x128xf32> to vector<32x128xf32>
    %152 = arith.mulf %147, %151 : vector<32x128xf32>
    %c0_57 = arith.constant 0 : index
    %c3_58 = arith.constant 3 : index
    %153 = vector.load %arg5[%c0_57, %c3_58] : memref<32x5xf32, #tpu.memory_space<vmem>>, vector<32x1xf32>
    %154 = vector.broadcast %153 : vector<32x1xf32> to vector<32x128xf32>
    %155 = arith.mulf %152, %154 : vector<32x128xf32>
    %c0_59 = arith.constant 0 : index
    %c3_60 = arith.constant 3 : index
    %156 = vector.load %arg6[%c0_59, %c3_60] : memref<32x5xf32, #tpu.memory_space<vmem>>, vector<32x1xf32>
    %157 = vector.broadcast %156 : vector<32x1xf32> to vector<32x128xf32>
    %158 = arith.addf %155, %157 : vector<32x128xf32>
    %159 = arith.addf %120, %158 : vector<32x128xf32>
    %c3_61 = arith.constant 3 : index
    %c0_62 = arith.constant 0 : index
    %c0_63 = arith.constant 0 : index
    %160 = vector.load %arg3[%c3_61, %c0_62, %c0_63] : memref<4x32x32xbf16, #tpu.memory_space<vmem>>, vector<1x32x32xbf16>
    %161 = vector.shape_cast %160 : vector<1x32x32xbf16> to vector<32x32xbf16>
    %162 = arith.truncf %158 : vector<32x128xf32> to vector<32x128xbf16>
    %cst_64 = arith.constant dense<0.000000e+00> : vector<32x128xf32>
    %163 = tpu.matmul %161, %162, %cst_64 {dimension_numbers = #tpu.dot_dimension_numbers<[1], [0], [0], [1], [0, 0, 1, 1], [], []>} : vector<32x32xbf16>, vector<32x128xbf16>, vector<32x128xf32> -> vector<32x128xf32>
    %164 = arith.addf %163, %159 : vector<32x128xf32>
    %c0_65 = arith.constant 0 : index
    %c4 = arith.constant 4 : index
    %165 = vector.load %arg4[%c0_65, %c4] : memref<32x5xf32, #tpu.memory_space<vmem>>, vector<32x1xf32>
    %166 = vector.broadcast %165 : vector<32x1xf32> to vector<32x128xf32>
    %167 = arith.addf %164, %166 : vector<32x128xf32>
    %168 = arith.negf %167 : vector<32x128xf32>
    %169 = math.exp %168 : vector<32x128xf32>
    %cst_66 = arith.constant 1.000000e+00 : f32
    %170 = vector.broadcast %cst_66 : f32 to vector<32x128xf32>
    %171 = arith.addf %170, %169 : vector<32x128xf32>
    %172 = arith.divf %170, %171 : vector<32x128xf32>
    %173 = arith.mulf %167, %172 : vector<32x128xf32>
    %cst_67 = arith.constant dense<0.000000e+00> : vector<128xf32>
    %174 = vector.multi_reduction <add>, %173, %cst_67 [0] : vector<32x128xf32> to vector<128xf32>
    %175 = vector.shape_cast %174 : vector<128xf32> to vector<1x128xf32>
    %cst_68 = arith.constant 3.200000e+01 : f32
    %176 = vector.broadcast %cst_68 : f32 to vector<1x128xf32>
    %177 = arith.divf %175, %176 : vector<1x128xf32>
    %178 = arith.mulf %173, %173 : vector<32x128xf32>
    %cst_69 = arith.constant dense<0.000000e+00> : vector<128xf32>
    %179 = vector.multi_reduction <add>, %178, %cst_69 [0] : vector<32x128xf32> to vector<128xf32>
    %180 = vector.shape_cast %179 : vector<128xf32> to vector<1x128xf32>
    %cst_70 = arith.constant 3.200000e+01 : f32
    %181 = vector.broadcast %cst_70 : f32 to vector<1x128xf32>
    %182 = arith.divf %180, %181 : vector<1x128xf32>
    %183 = arith.mulf %177, %177 : vector<1x128xf32>
    %184 = arith.subf %182, %183 : vector<1x128xf32>
    %185 = vector.broadcast %177 : vector<1x128xf32> to vector<32x128xf32>
    %186 = arith.subf %173, %185 : vector<32x128xf32>
    %cst_71 = arith.constant 1.000000e-01 : f32
    %187 = vector.broadcast %cst_71 : f32 to vector<1x128xf32>
    %188 = arith.addf %184, %187 : vector<1x128xf32>
    %189 = math.rsqrt %188 : vector<1x128xf32>
    %190 = vector.broadcast %189 : vector<1x128xf32> to vector<32x128xf32>
    %191 = arith.mulf %186, %190 : vector<32x128xf32>
    %c0_72 = arith.constant 0 : index
    %c4_73 = arith.constant 4 : index
    %192 = vector.load %arg5[%c0_72, %c4_73] : memref<32x5xf32, #tpu.memory_space<vmem>>, vector<32x1xf32>
    %193 = vector.broadcast %192 : vector<32x1xf32> to vector<32x128xf32>
    %194 = arith.mulf %191, %193 : vector<32x128xf32>
    %c0_74 = arith.constant 0 : index
    %c4_75 = arith.constant 4 : index
    %195 = vector.load %arg6[%c0_74, %c4_75] : memref<32x5xf32, #tpu.memory_space<vmem>>, vector<32x1xf32>
    %196 = vector.broadcast %195 : vector<32x1xf32> to vector<32x128xf32>
    %197 = arith.addf %194, %196 : vector<32x128xf32>
    %c0_76 = arith.constant 0 : index
    %c0_77 = arith.constant 0 : index
    %198 = vector.load %arg7[%c0_76, %c0_77] : memref<32x32xbf16, #tpu.memory_space<vmem>>, vector<32x32xbf16>
    %199 = arith.truncf %197 : vector<32x128xf32> to vector<32x128xbf16>
    %cst_78 = arith.constant dense<0.000000e+00> : vector<32x128xf32>
    %200 = tpu.matmul %198, %199, %cst_78 {dimension_numbers = #tpu.dot_dimension_numbers<[1], [0], [0], [1], [0, 0, 1, 1], [], []>} : vector<32x32xbf16>, vector<32x128xbf16>, vector<32x128xf32> -> vector<32x128xf32>
    %c0_79 = arith.constant 0 : index
    %c0_80 = arith.constant 0 : index
    %201 = vector.load %arg8[%c0_79, %c0_80] : memref<32x1xf32, #tpu.memory_space<vmem>>, vector<32x1xf32>
    %202 = vector.broadcast %201 : vector<32x1xf32> to vector<32x128xf32>
    %203 = arith.addf %200, %202 : vector<32x128xf32>
    %c0_81 = arith.constant 0 : index
    %c0_82 = arith.constant 0 : index
    %204 = vector.load %arg9[%c0_81, %c0_82] : memref<32x128xf32, #tpu.memory_space<vmem>>, vector<32x128xf32>
    tpu.vector_store %arg9[%c0_81, %c0_82], %203 {strides = array<i32>} : memref<32x128xf32, #tpu.memory_space<vmem>>, vector<32x128xf32>,
    return
  }
  func.func @transform_0(%arg0: i32) -> (i32, i32) {
    %c0_i32 = arith.constant 0 : i32
    %c0_i32_0 = arith.constant 0 : i32
    return %c0_i32, %arg0 : i32, i32
  }
  func.func @transform_1(%arg0: i32) -> (i32, i32) {
    %c0_i32 = arith.constant 0 : i32
    %c0_i32_0 = arith.constant 0 : i32
    %c0_i32_1 = arith.constant 0 : i32
    return %c0_i32, %c0_i32_0 : i32, i32
  }
  func.func @transform_2(%arg0: i32) -> (i32, i32, i32) {
    %c0_i32 = arith.constant 0 : i32
    %c0_i32_0 = arith.constant 0 : i32
    %c0_i32_1 = arith.constant 0 : i32
    %c0_i32_2 = arith.constant 0 : i32
    return %c0_i32, %c0_i32_0, %c0_i32_1 : i32, i32, i32
  }
  func.func @transform_3(%arg0: i32) -> (i32, i32) {
    %c0_i32 = arith.constant 0 : i32
    %c0_i32_0 = arith.constant 0 : i32
    %c0_i32_1 = arith.constant 0 : i32
    return %c0_i32, %c0_i32_0 : i32, i32
  }
  func.func @transform_4(%arg0: i32) -> (i32, i32) {
    %c0_i32 = arith.constant 0 : i32
    %c0_i32_0 = arith.constant 0 : i32
    %c0_i32_1 = arith.constant 0 : i32
    return %c0_i32, %c0_i32_0 : i32, i32
  }
  func.func @transform_5(%arg0: i32) -> (i32, i32) {
    %c0_i32 = arith.constant 0 : i32
    %c0_i32_0 = arith.constant 0 : i32
    %c0_i32_1 = arith.constant 0 : i32
    return %c0_i32, %c0_i32_0 : i32, i32
  }
  func.func @transform_6(%arg0: i32) -> (i32, i32) {
    %c0_i32 = arith.constant 0 : i32
    %c0_i32_0 = arith.constant 0 : i32
    %c0_i32_1 = arith.constant 0 : i32
    return %c0_i32, %c0_i32_0 : i32, i32
  }
  func.func @transform_7(%arg0: i32) -> (i32, i32) {
    %c0_i32 = arith.constant 0 : i32
    %c0_i32_0 = arith.constant 0 : i32
    %c0_i32_1 = arith.constant 0 : i32
    return %c0_i32, %c0_i32_0 : i32, i32
  }
  func.func @transform_8(%arg0: i32) -> (i32, i32) {
    %c0_i32 = arith.constant 0 : i32
    %c0_i32_0 = arith.constant 0 : i32
    return %c0_i32, %arg0 : i32, i32
  }
}

</mosaic_0001>

<llo_original>
// kernel: encoder_forward.1
$region0: #{encoder_forward.1}
  #allocation0 [shape = 'u32[]', space=smem, size = 0x4, offset = 0x4, fixed_abs, tag = 'smem constant byte address 0x4 - core index']
  #allocation1 [shape = 'u32[144,128]{1,0:T(1,128)}', space=vmem, size = 0x12000, scoped, tag = 'internal scratch']
  %s0 = inlined_call_operand.vmem [shape: f32[64,128], index: 0, kind: input, shape index: {}]
  %s1 = inlined_call_operand.vmem [shape: bf16[32,64], index: 1, kind: input, shape index: {}]
  %s2 = inlined_call_operand.vmem [shape: bf16[4,32,32], index: 2, kind: input, shape index: {}]
  %s3 = inlined_call_operand.vmem [shape: f32[32,5], index: 3, kind: input, shape index: {}]
  %s4 = inlined_call_operand.vmem [shape: f32[32,5], index: 4, kind: input, shape index: {}]
  %s5 = inlined_call_operand.vmem [shape: f32[32,5], index: 5, kind: input, shape index: {}]
  %s6 = inlined_call_operand.vmem [shape: bf16[32,32], index: 6, kind: input, shape index: {}]
  %s7 = inlined_call_operand.vmem [shape: f32[32,1], index: 7, kind: input, shape index: {}]
  %s8 = inlined_call_operand.vmem [shape: f32[32,128], index: 8, kind: output, shape index: {}]
  %s9 = sld [smem:[#allocation0]]
  $region42: #{encoder_forward.1} parent=0
    _
  %s11 = ssub.s32 1, %s9
  %s12 = scalar_select 0, %s11, %s9
  // Predicated region
  $region2: #{encoder_forward.1} parent=0 // pred_check
    _
  $region3: #{encoder_forward.1} parent=0 // pred_check_branch
    %14 = sbr.rel (0) target = $region5
  $region4: #{encoder_forward.1} parent=0 // pred_region
    _
  $region5: #{encoder_forward.1} parent=0 // pred_fallthru
    _
  // Predicated region
  $region6: #{encoder_forward.1} parent=0 // pred_check
    _
  $region7: #{encoder_forward.1} parent=0 // pred_check_branch
    %16 = sbr.rel (0) target = $region9
  $region8: #{encoder_forward.1} parent=0 // pred_region
    _
  $region9: #{encoder_forward.1} parent=0 // pred_fallthru
    _
  // Predicated region
  $region10: #{encoder_forward.1} parent=0 // pred_check
    _
  $region11: #{encoder_forward.1} parent=0 // pred_check_branch
    %18 = sbr.rel (0) target = $region13
  $region12: #{encoder_forward.1} parent=0 // pred_region
    _
  $region13: #{encoder_forward.1} parent=0 // pred_fallthru
    _
  // Predicated region
  $region14: #{encoder_forward.1} parent=0 // pred_check
    _
  $region15: #{encoder_forward.1} parent=0 // pred_check_branch
    %20 = sbr.rel (0) target = $region17
  $region16: #{encoder_forward.1} parent=0 // pred_region
    _
  $region17: #{encoder_forward.1} parent=0 // pred_fallthru
    _
  // Predicated region
  $region18: #{encoder_forward.1} parent=0 // pred_check
    _
  $region19: #{encoder_forward.1} parent=0 // pred_check_branch
    %22 = sbr.rel (0) target = $region21
  $region20: #{encoder_forward.1} parent=0 // pred_region
    _
  $region21: #{encoder_forward.1} parent=0 // pred_fallthru
    _
  // Predicated region
  $region22: #{encoder_forward.1} parent=0 // pred_check
    _
  $region23: #{encoder_forward.1} parent=0 // pred_check_branch
    %24 = sbr.rel (0) target = $region25
  $region24: #{encoder_forward.1} parent=0 // pred_region
    _
  $region25: #{encoder_forward.1} parent=0 // pred_fallthru
    _
  // Predicated region
  $region26: #{encoder_forward.1} parent=0 // pred_check
    _
  $region27: #{encoder_forward.1} parent=0 // pred_check_branch
    %26 = sbr.rel (0) target = $region29
  $region28: #{encoder_forward.1} parent=0 // pred_region
    _
  $region29: #{encoder_forward.1} parent=0 // pred_fallthru
    _
  // Predicated region
  $region30: #{encoder_forward.1} parent=0 // pred_check
    _
  $region31: #{encoder_forward.1} parent=0 // pred_check_branch
    %28 = sbr.rel (0) target = $region33
  $region32: #{encoder_forward.1} parent=0 // pred_region
    _
  $region33: #{encoder_forward.1} parent=0 // pred_fallthru
    _
  %v30 = vld [vmem:[%s0] sm:$0xff]
  %v31 = vld [vmem:[%s0 + $0x8] sm:$0xff]
  %v32 = vld [vmem:[%s0 + $0x10] sm:$0xff]
  %v33 = vld [vmem:[%s0 + $0x18] sm:$0xff]
  %v34 = vld [vmem:[%s0 + $0x20] sm:$0xff]
  %v35 = vld [vmem:[%s0 + $0x28] sm:$0xff]
  %v36 = vld [vmem:[%s0 + $0x30] sm:$0xff]
  %v37 = vld [vmem:[%s0 + $0x38] sm:$0xff]
  %v38 = vmul.f32 %v30, %v30
  %v39 = vmul.f32 %v31, %v31
  %v40 = vmul.f32 %v32, %v32
  %v41 = vmul.f32 %v33, %v33
  %v42 = vmul.f32 %v34, %v34
  %v43 = vmul.f32 %v35, %v35
  %v44 = vmul.f32 %v36, %v36
  %v45 = vmul.f32 %v37, %v37
  %v46 = vadd.f32 %v38, %v39
  %v47 = vadd.f32 %v46, %v40
  %v48 = vadd.f32 %v47, %v41
  %v49 = vadd.f32 %v48, %v42
  %v50 = vadd.f32 %v49, %v43
  %v51 = vadd.f32 %v50, %v44
  %v52 = vadd.f32 %v51, %v45
  %v53 = vrot.slane %v52, 4
  %v54 = vadd.f32 %v52, %v53
  %v55 = vrot.slane %v54, 2
  %v56 = vadd.f32 %v54, %v55
  %v57 = vrot.slane %v56, 1
  %v58 = vadd.f32 %v56, %v57
  %v59 = vrsqrt.pop %v58
  %v60 = vmul.f32 %v30, %v59
  %v61 = vmul.f32 %v31, %v59
  %v62 = vmul.f32 %v32, %v59
  %v63 = vmul.f32 %v33, %v59
  %v64 = vmul.f32 %v34, %v59
  %v65 = vmul.f32 %v35, %v59
  %v66 = vmul.f32 %v36, %v59
  %v67 = vmul.f32 %v37, %v59
  %v68 = vld [vmem:[%s1] sm:$0xf]
  %v69 = vld [vmem:[%s1 + $0x4] sm:$0xf]
  %v70 = vld [vmem:[%s1 + $0x8] sm:$0xf]
  %v71 = vld [vmem:[%s1 + $0xc] sm:$0xf]
  %v72 = vpack.c.bf16 %v61, %v60
  %v73 = vpack.c.bf16 %v63, %v62
  %v74 = vpack.c.bf16 %v65, %v64
  %v75 = vpack.c.bf16 %v67, %v66
  %v76 = vld [vmem:[%s3] sm:$0xff]
  %v77 = vld [vmem:[%s3 + $0x8] sm:$0xff]
  %v78 = vld [vmem:[%s3 + $0x10] sm:$0xff]
  %v79 = vld [vmem:[%s3 + $0x18] sm:$0xff]
  %81 = vset.pattern.permute.xlu0 0
  %82 = vperm.xlu0 %81, %v76
  %v83 = vpop.permute.xlu0 %82
  %86 = vset.pattern.permute.xlu0 0
  %87 = vperm.xlu0 %86, %v77
  %v88 = vpop.permute.xlu0 %87
  %91 = vset.pattern.permute.xlu0 0
  %92 = vperm.xlu0 %91, %v78
  %v93 = vpop.permute.xlu0 %92
  %96 = vset.pattern.permute.xlu0 0
  %97 = vperm.xlu0 %96, %v79
  %v98 = vpop.permute.xlu0 %97
  %v104 = vunpack.c.l.b16 %v68
  %v105 = vunpack.c.l.b16 %v69
  %v106 = vunpack.c.l.b16 %v70
  %v107 = vunpack.c.l.b16 %v71
  %v108 = vpack.c.b16 %v105, %v104
  %v109 = vpack.c.b16 %v107, %v106
  %vm110 = vcmask 523264
  %v112 = vsel %vm110, %v108, 0
  %v115 = vsel %vm110, %v109, 0
  %117 = vmatprep.subr.bf16.mxu0 0
  %118 = vmatpush1.bf16.msra.mxu0 %v72
  %119 = vmatprep.subr.bf16.mxu0 0
  %120 = vmatpush1.bf16.msra.mxu0 %v73
  %121 = vmatprep.subr.bf16.mxu0 0
  %122 = vmatpush1.bf16.msra.mxu0 %v74
  %123 = vmatprep.subr.bf16.mxu0 0
  %124 = vmatpush1.bf16.msra.mxu0 %v75
  %125 = vmatprep.subr.bf16.mxu0 0
  %126 = vmatpush1.bf16.msra.mxu0 0
  %127 = vmatprep.subr.bf16.mxu0 0
  %128 = vmatpush1.bf16.msra.mxu0 0
  %129 = vmatprep.subr.bf16.mxu0 0
  %130 = vmatpush1.bf16.msra.mxu0 0
  %131 = vmatprep.subr.bf16.mxu0 0
  %132 = vmatpush1.bf16.msra.mxu0 0
  %133 = vmatprep.subr.bf16.mxu0 0
  %134 = vmatpush1.bf16.msra.mxu0 0
  %135 = vmatprep.subr.bf16.mxu0 0
  %136 = vmatpush1.bf16.msra.mxu0 0
  %137 = vmatprep.subr.bf16.mxu0 0
  %138 = vmatpush1.bf16.msra.mxu0 0
  %139 = vmatprep.subr.bf16.mxu0 0
  %140 = vmatpush1.bf16.msra.mxu0 0
  %141 = vmatprep.subr.bf16.mxu0 0
  %142 = vmatpush1.bf16.msra.mxu0 0
  %143 = vmatprep.subr.bf16.mxu0 0
  %144 = vmatpush1.bf16.msra.mxu0 0
  %145 = vmatprep.subr.bf16.mxu0 0
  %146 = vmatpush1.bf16.msra.mxu0 0
  %147 = vmatprep.subr.bf16.mxu0 0
  %148 = vmatpush1.bf16.msra.mxu0 0
  %149 = vmatprep.mubr.bf16.mxu0 0
  %150 = vmatmul.mubr.bf16.gmra.mrb[0].mxu0 %v112
  %v151 = vpop.f32.mrb[0].mxu0
  %v152 = vadd.f32 %v83, %v151
  %v153 = vpop.f32.mrb[0].mxu0
  %v154 = vpop.f32.mrb[0].mxu0
  %v155 = vadd.f32 %v88, %v154
  %v156 = vpop.f32.mrb[0].mxu0
  %157 = vmatprep.mubr.bf16.mxu0 0
  %158 = vmatmul.mubr.bf16.gmra.mrb[0].mxu0 %v115
  %v159 = vpop.f32.mrb[0].mxu0
  %v160 = vadd.f32 %v93, %v159
  %v161 = vpop.f32.mrb[0].mxu0
  %v162 = vpop.f32.mrb[0].mxu0
  %v163 = vadd.f32 %v98, %v162
  %v164 = vpop.f32.mrb[0].mxu0
  %165 = vdwg.mxu0
  %v166 = vxor.u32 %v152, 2147483648
  %v167 = vxor.u32 %v155, 2147483648
  %v168 = vxor.u32 %v160, 2147483648
  %v169 = vxor.u32 %v163, 2147483648
  %v170 = vmul.f32 %v166, 1.442695
  %v171 = vpow.pop %v170
  %v172 = vmul.f32 %v167, 1.442695
  %v173 = vpow.pop %v172
  %v174 = vmul.f32 %v168, 1.442695
  %v175 = vpow.pop %v174
  %v176 = vmul.f32 %v169, 1.442695
  %v177 = vpow.pop %v176
  %v178 = vadd.f32 %v171, 1.0
  %v179 = vadd.f32 %v173, 1.0
  %v180 = vadd.f32 %v175, 1.0
  %v181 = vadd.f32 %v177, 1.0
  %v182 = vrcp.pop %v178
  %v183 = vmul.f32 1.0, %v182
  %v184 = vrcp.pop %v179
  %v185 = vmul.f32 1.0, %v184
  %v186 = vrcp.pop %v180
  %v187 = vmul.f32 1.0, %v186
  %v188 = vrcp.pop %v181
  %v189 = vmul.f32 1.0, %v188
  %v190 = vmul.f32 %v152, %v183
  %v191 = vmul.f32 %v155, %v185
  %v192 = vmul.f32 %v160, %v187
  %v193 = vmul.f32 %v163, %v189
  %v194 = vadd.f32 %v190, %v191
  %v195 = vadd.f32 %v194, %v192
  %v196 = vadd.f32 %v195, %v193
  %v197 = vrot.slane %v196, 4
  %v198 = vadd.f32 %v196, %v197
  %v199 = vrot.slane %v198, 2
  %v200 = vadd.f32 %v198, %v199
  %v201 = vrot.slane %v200, 1
  %v202 = vadd.f32 %v200, %v201
  %v203 = vrcp.pop 32.0
  %v204 = vmul.f32 %v202, %v203
  %v205 = vmul.f32 %v190, %v190
  %v206 = vmul.f32 %v191, %v191
  %v207 = vmul.f32 %v192, %v192
  %v208 = vmul.f32 %v193, %v193
  %v209 = vadd.f32 %v205, %v206
  %v210 = vadd.f32 %v209, %v207
  %v211 = vadd.f32 %v210, %v208
  %v212 = vrot.slane %v211, 4
  %v213 = vadd.f32 %v211, %v212
  %v214 = vrot.slane %v213, 2
  %v215 = vadd.f32 %v213, %v214
  %v216 = vrot.slane %v215, 1
  %v217 = vadd.f32 %v215, %v216
  %v218 = vmul.f32 %v217, %v203
  %v219 = vmul.f32 %v204, %v204
  %v220 = vsub.f32 %v218, %v219
  %v221 = vsub.f32 %v190, %v204
  %v222 = vsub.f32 %v191, %v204
  %v223 = vsub.f32 %v192, %v204
  %v224 = vsub.f32 %v193, %v204
  %v225 = vadd.f32 %v220, 0.1
  %v226 = vrsqrt.pop %v225
  %v227 = vmul.f32 %v221, %v226
  %v228 = vmul.f32 %v222, %v226
  %v229 = vmul.f32 %v223, %v226
  %v230 = vmul.f32 %v224, %v226
  %v231 = vld [vmem:[%s4] sm:$0xff]
  %v232 = vld [vmem:[%s4 + $0x8] sm:$0xff]
  %v233 = vld [vmem:[%s4 + $0x10] sm:$0xff]
  %v234 = vld [vmem:[%s4 + $0x18] sm:$0xff]
  %236 = vset.pattern.permute.xlu0 0
  %237 = vperm.xlu0 %236, %v231
  %v238 = vpop.permute.xlu0 %237
  %241 = vset.pattern.permute.xlu0 0
  %242 = vperm.xlu0 %241, %v232
  %v243 = vpop.permute.xlu0 %242
  %246 = vset.pattern.permute.xlu0 0
  %247 = vperm.xlu0 %246, %v233
  %v248 = vpop.permute.xlu0 %247
  %251 = vset.pattern.permute.xlu0 0
  %252 = vperm.xlu0 %251, %v234
  %v253 = vpop.permute.xlu0 %252
  %v255 = vmul.f32 %v227, %v238
  %v256 = vmul.f32 %v228, %v243
  %v257 = vmul.f32 %v229, %v248
  %v258 = vmul.f32 %v230, %v253
  %v259 = vld [vmem:[%s5] sm:$0xff]
  %v260 = vld [vmem:[%s5 + $0x8] sm:$0xff]
  %v261 = vld [vmem:[%s5 + $0x10] sm:$0xff]
  %v262 = vld [vmem:[%s5 + $0x18] sm:$0xff]
  %264 = vset.pattern.permute.xlu0 0
  %265 = vperm.xlu0 %264, %v259
  %v266 = vpop.permute.xlu0 %265
  %269 = vset.pattern.permute.xlu0 0
  %270 = vperm.xlu0 %269, %v260
  %v271 = vpop.permute.xlu0 %270
  %274 = vset.pattern.permute.xlu0 0
  %275 = vperm.xlu0 %274, %v261
  %v276 = vpop.permute.xlu0 %275
  %279 = vset.pattern.permute.xlu0 0
  %280 = vperm.xlu0 %279, %v262
  %v281 = vpop.permute.xlu0 %280
  %v283 = vadd.f32 %v255, %v266
  %v284 = vadd.f32 %v256, %v271
  %v285 = vadd.f32 %v257, %v276
  %v286 = vadd.f32 %v258, %v281
  %v287 = vld [vmem:[%s2] sm:$0xf]
  %v288 = vld [vmem:[%s2 + $0x4] sm:$0xf]
  %v289 = vld [vmem:[%s2 + $0x8] sm:$0xf]
  %v290 = vld [vmem:[%s2 + $0xc] sm:$0xf]
  %v291 = vpack.c.bf16 %v284, %v283
  %v292 = vpack.c.bf16 %v286, %v285
  %v297 = vunpack.c.l.b16 %v287
  %v298 = vunpack.c.l.b16 %v288
  %v299 = vunpack.c.l.b16 %v289
  %v300 = vunpack.c.l.b16 %v290
  %v301 = vpack.c.b16 %v298, %v297
  %v302 = vpack.c.b16 %v300, %v299
  %vm303 = vcmask 261120
  %v305 = vsel %vm303, %v301, 0
  %v308 = vsel %vm303, %v302, 0
  %310 = vmatprep.subr.bf16.mxu0 0
  %311 = vmatpush1.bf16.msra.mxu0 %v291
  %312 = vmatprep.subr.bf16.mxu0 0
  %313 = vmatpush1.bf16.msra.mxu0 %v292
  %314 = vmatprep.subr.bf16.mxu0 0
  %315 = vmatpush1.bf16.msra.mxu0 0
  %316 = vmatprep.subr.bf16.mxu0 0
  %317 = vmatpush1.bf16.msra.mxu0 0
  %318 = vmatprep.subr.bf16.mxu0 0
  %319 = vmatpush1.bf16.msra.mxu0 0
  %320 = vmatprep.subr.bf16.mxu0 0
  %321 = vmatpush1.bf16.msra.mxu0 0
  %322 = vmatprep.subr.bf16.mxu0 0
  %323 = vmatpush1.bf16.msra.mxu0 0
  %324 = vmatprep.subr.bf16.mxu0 0
  %325 = vmatpush1.bf16.msra.mxu0 0
  %326 = vmatprep.subr.bf16.mxu0 0
  %327 = vmatpush1.bf16.msra.mxu0 0
  %328 = vmatprep.subr.bf16.mxu0 0
  %329 = vmatpush1.bf16.msra.mxu0 0
  %330 = vmatprep.subr.bf16.mxu0 0
  %331 = vmatpush1.bf16.msra.mxu0 0
  %332 = vmatprep.subr.bf16.mxu0 0
  %333 = vmatpush1.bf16.msra.mxu0 0
  %334 = vmatprep.subr.bf16.mxu0 0
  %335 = vmatpush1.bf16.msra.mxu0 0
  %336 = vmatprep.subr.bf16.mxu0 0
  %337 = vmatpush1.bf16.msra.mxu0 0
  %338 = vmatprep.subr.bf16.mxu0 0
  %339 = vmatpush1.bf16.msra.mxu0 0
  %340 = vmatprep.subr.bf16.mxu0 0
  %341 = vmatpush1.bf16.msra.mxu0 0
  %342 = vmatprep.mubr.bf16.mxu0 0
  %343 = vmatmul.mubr.bf16.gmra.mrb[0].mxu0 %v305
  %v344 = vpop.f32.mrb[0].mxu0
  %v345 = vadd.f32 %v283, %v344
  %v346 = vpop.f32.mrb[0].mxu0
  %v347 = vpop.f32.mrb[0].mxu0
  %v348 = vadd.f32 %v284, %v347
  %v349 = vpop.f32.mrb[0].mxu0
  %350 = vmatprep.mubr.bf16.mxu0 0
  %351 = vmatmul.mubr.bf16.gmra.mrb[0].mxu0 %v308
  %v352 = vpop.f32.mrb[0].mxu0
  %v353 = vadd.f32 %v285, %v352
  %v354 = vpop.f32.mrb[0].mxu0
  %v355 = vpop.f32.mrb[0].mxu0
  %v356 = vadd.f32 %v286, %v355
  %v357 = vpop.f32.mrb[0].mxu0
  %358 = vdwg.mxu0
  %359 = vset.pattern.permute.xlu0 1
  %360 = vperm.xlu0 %359, %v76
  %v361 = vpop.permute.xlu0 %360
  %363 = vset.pattern.permute.xlu0 1
  %364 = vperm.xlu0 %363, %v77
  %v365 = vpop.permute.xlu0 %364
  %367 = vset.pattern.permute.xlu0 1
  %368 = vperm.xlu0 %367, %v78
  %v369 = vpop.permute.xlu0 %368
  %371 = vset.pattern.permute.xlu0 1
  %372 = vperm.xlu0 %371, %v79
  %v373 = vpop.permute.xlu0 %372
  %v375 = vadd.f32 %v345, %v361
  %v376 = vadd.f32 %v348, %v365
  %v377 = vadd.f32 %v353, %v369
  %v378 = vadd.f32 %v356, %v373
  %v379 = vxor.u32 %v375, 2147483648
  %v380 = vxor.u32 %v376, 2147483648
  %v381 = vxor.u32 %v377, 2147483648
  %v382 = vxor.u32 %v378, 2147483648
  %v383 = vmul.f32 %v379, 1.442695
  %v384 = vpow.pop %v383
  %v385 = vmul.f32 %v380, 1.442695
  %v386 = vpow.pop %v385
  %v387 = vmul.f32 %v381, 1.442695
  %v388 = vpow.pop %v387
  %v389 = vmul.f32 %v382, 1.442695
  %v390 = vpow.pop %v389
  %v391 = vadd.f32 %v384, 1.0
  %v392 = vadd.f32 %v386, 1.0
  %v393 = vadd.f32 %v388, 1.0
  %v394 = vadd.f32 %v390, 1.0
  %v395 = vrcp.pop %v391
  %v396 = vmul.f32 1.0, %v395
  %v397 = vrcp.pop %v392
  %v398 = vmul.f32 1.0, %v397
  %v399 = vrcp.pop %v393
  %v400 = vmul.f32 1.0, %v399
  %v401 = vrcp.pop %v394
  %v402 = vmul.f32 1.0, %v401
  %v403 = vmul.f32 %v375, %v396
  %v404 = vmul.f32 %v376, %v398
  %v405 = vmul.f32 %v377, %v400
  %v406 = vmul.f32 %v378, %v402
  %v407 = vadd.f32 %v403, %v404
  %v408 = vadd.f32 %v407, %v405
  %v409 = vadd.f32 %v408, %v406
  %v410 = vrot.slane %v409, 4
  %v411 = vadd.f32 %v409, %v410
  %v412 = vrot.slane %v411, 2
  %v413 = vadd.f32 %v411, %v412
  %v414 = vrot.slane %v413, 1
  %v415 = vadd.f32 %v413, %v414
  %v416 = vmul.f32 %v415, %v203
  %v417 = vmul.f32 %v403, %v403
  %v418 = vmul.f32 %v404, %v404
  %v419 = vmul.f32 %v405, %v405
  %v420 = vmul.f32 %v406, %v406
  %v421 = vadd.f32 %v417, %v418
  %v422 = vadd.f32 %v421, %v419
  %v423 = vadd.f32 %v422, %v420
  %v424 = vrot.slane %v423, 4
  %v425 = vadd.f32 %v423, %v424
  %v426 = vrot.slane %v425, 2
  %v427 = vadd.f32 %v425, %v426
  %v428 = vrot.slane %v427, 1
  %v429 = vadd.f32 %v427, %v428
  %v430 = vmul.f32 %v429, %v203
  %v431 = vmul.f32 %v416, %v416
  %v432 = vsub.f32 %v430, %v431
  %v433 = vsub.f32 %v403, %v416
  %v434 = vsub.f32 %v404, %v416
  %v435 = vsub.f32 %v405, %v416
  %v436 = vsub.f32 %v406, %v416
  %v437 = vadd.f32 %v432, 0.1
  %v438 = vrsqrt.pop %v437
  %v439 = vmul.f32 %v433, %v438
  %v440 = vmul.f32 %v434, %v438
  %v441 = vmul.f32 %v435, %v438
  %v442 = vmul.f32 %v436, %v438
  %443 = vset.pattern.permute.xlu0 1
  %444 = vperm.xlu0 %443, %v231
  %v445 = vpop.permute.xlu0 %444
  %447 = vset.pattern.permute.xlu0 1
  %448 = vperm.xlu0 %447, %v232
  %v449 = vpop.permute.xlu0 %448
  %451 = vset.pattern.permute.xlu0 1
  %452 = vperm.xlu0 %451, %v233
  %v453 = vpop.permute.xlu0 %452
  %455 = vset.pattern.permute.xlu0 1
  %456 = vperm.xlu0 %455, %v234
  %v457 = vpop.permute.xlu0 %456
  %v459 = vmul.f32 %v439, %v445
  %v460 = vmul.f32 %v440, %v449
  %v461 = vmul.f32 %v441, %v453
  %v462 = vmul.f32 %v442, %v457
  %463 = vset.pattern.permute.xlu0 1
  %464 = vperm.xlu0 %463, %v259
  %v465 = vpop.permute.xlu0 %464
  %467 = vset.pattern.permute.xlu0 1
  %468 = vperm.xlu0 %467, %v260
  %v469 = vpop.permute.xlu0 %468
  %471 = vset.pattern.permute.xlu0 1
  %472 = vperm.xlu0 %471, %v261
  %v473 = vpop.permute.xlu0 %472
  %475 = vset.pattern.permute.xlu0 1
  %476 = vperm.xlu0 %475, %v262
  %v477 = vpop.permute.xlu0 %476
  %v479 = vadd.f32 %v459, %v465
  %v480 = vadd.f32 %v460, %v469
  %v481 = vadd.f32 %v461, %v473
  %v482 = vadd.f32 %v462, %v477
  %v483 = vadd.f32 %v283, %v479
  %v484 = vadd.f32 %v284, %v480
  %v485 = vadd.f32 %v285, %v481
  %v486 = vadd.f32 %v286, %v482
  %s487 = scalar_lea.vmem %s2, 16
  %v488 = vld [vmem:[%s487] sm:$0xf]
  %v489 = vld [vmem:[%s487 + $0x4] sm:$0xf]
  %v490 = vld [vmem:[%s487 + $0x8] sm:$0xf]
  %v491 = vld [vmem:[%s487 + $0xc] sm:$0xf]
  %v492 = vpack.c.bf16 %v480, %v479
  %v493 = vpack.c.bf16 %v482, %v481
  %v498 = vunpack.c.l.b16 %v488
  %v499 = vunpack.c.l.b16 %v489
  %v500 = vunpack.c.l.b16 %v490
  %v501 = vunpack.c.l.b16 %v491
  %v502 = vpack.c.b16 %v499, %v498
  %v503 = vpack.c.b16 %v501, %v500
  %v505 = vsel %vm303, %v502, 0
  %v508 = vsel %vm303, %v503, 0
  %510 = vmatprep.subr.bf16.mxu0 0
  %511 = vmatpush1.bf16.msra.mxu0 %v492
  %512 = vmatprep.subr.bf16.mxu0 0
  %513 = vmatpush1.bf16.msra.mxu0 %v493
  %514 = vmatprep.subr.bf16.mxu0 0
  %515 = vmatpush1.bf16.msra.mxu0 0
  %516 = vmatprep.subr.bf16.mxu0 0
  %517 = vmatpush1.bf16.msra.mxu0 0
  %518 = vmatprep.subr.bf16.mxu0 0
  %519 = vmatpush1.bf16.msra.mxu0 0
  %520 = vmatprep.subr.bf16.mxu0 0
  %521 = vmatpush1.bf16.msra.mxu0 0
  %522 = vmatprep.subr.bf16.mxu0 0
  %523 = vmatpush1.bf16.msra.mxu0 0
  %524 = vmatprep.subr.bf16.mxu0 0
  %525 = vmatpush1.bf16.msra.mxu0 0
  %526 = vmatprep.subr.bf16.mxu0 0
  %527 = vmatpush1.bf16.msra.mxu0 0
  %528 = vmatprep.subr.bf16.mxu0 0
  %529 = vmatpush1.bf16.msra.mxu0 0
  %530 = vmatprep.subr.bf16.mxu0 0
  %531 = vmatpush1.bf16.msra.mxu0 0
  %532 = vmatprep.subr.bf16.mxu0 0
  %533 = vmatpush1.bf16.msra.mxu0 0
  %534 = vmatprep.subr.bf16.mxu0 0
  %535 = vmatpush1.bf16.msra.mxu0 0
  %536 = vmatprep.subr.bf16.mxu0 0
  %537 = vmatpush1.bf16.msra.mxu0 0
  %538 = vmatprep.subr.bf16.mxu0 0
  %539 = vmatpush1.bf16.msra.mxu0 0
  %540 = vmatprep.subr.bf16.mxu0 0
  %541 = vmatpush1.bf16.msra.mxu0 0
  %542 = vmatprep.mubr.bf16.mxu0 0
  %543 = vmatmul.mubr.bf16.gmra.mrb[0].mxu0 %v505
  %v544 = vpop.f32.mrb[0].mxu0
  %v545 = vadd.f32 %v483, %v544
  %v546 = vpop.f32.mrb[0].mxu0
  %v547 = vpop.f32.mrb[0].mxu0
  %v548 = vadd.f32 %v484, %v547
  %v549 = vpop.f32.mrb[0].mxu0
  %550 = vmatprep.mubr.bf16.mxu0 0
  %551 = vmatmul.mubr.bf16.gmra.mrb[0].mxu0 %v508
  %v552 = vpop.f32.mrb[0].mxu0
  %v553 = vadd.f32 %v485, %v552
  %v554 = vpop.f32.mrb[0].mxu0
  %v555 = vpop.f32.mrb[0].mxu0
  %v556 = vadd.f32 %v486, %v555
  %v557 = vpop.f32.mrb[0].mxu0
  %558 = vdwg.mxu0
  %559 = vset.pattern.permute.xlu0 2
  %560 = vperm.xlu0 %559, %v76
  %v561 = vpop.permute.xlu0 %560
  %563 = vset.pattern.permute.xlu0 2
  %564 = vperm.xlu0 %563, %v77
  %v565 = vpop.permute.xlu0 %564
  %567 = vset.pattern.permute.xlu0 2
  %568 = vperm.xlu0 %567, %v78
  %v569 = vpop.permute.xlu0 %568
  %571 = vset.pattern.permute.xlu0 2
  %572 = vperm.xlu0 %571, %v79
  %v573 = vpop.permute.xlu0 %572
  %v575 = vadd.f32 %v545, %v561
  %v576 = vadd.f32 %v548, %v565
  %v577 = vadd.f32 %v553, %v569
  %v578 = vadd.f32 %v556, %v573
  %v579 = vxor.u32 %v575, 2147483648
  %v580 = vxor.u32 %v576, 2147483648
  %v581 = vxor.u32 %v577, 2147483648
  %v582 = vxor.u32 %v578, 2147483648
  %v583 = vmul.f32 %v579, 1.442695
  %v584 = vpow.pop %v583
  %v585 = vmul.f32 %v580, 1.442695
  %v586 = vpow.pop %v585
  %v587 = vmul.f32 %v581, 1.442695
  %v588 = vpow.pop %v587
  %v589 = vmul.f32 %v582, 1.442695
  %v590 = vpow.pop %v589
  %v591 = vadd.f32 %v584, 1.0
  %v592 = vadd.f32 %v586, 1.0
  %v593 = vadd.f32 %v588, 1.0
  %v594 = vadd.f32 %v590, 1.0
  %v595 = vrcp.pop %v591
  %v596 = vmul.f32 1.0, %v595
  %v597 = vrcp.pop %v592
  %v598 = vmul.f32 1.0, %v597
  %v599 = vrcp.pop %v593
  %v600 = vmul.f32 1.0, %v599
  %v601 = vrcp.pop %v594
  %v602 = vmul.f32 1.0, %v601
  %v603 = vmul.f32 %v575, %v596
  %v604 = vmul.f32 %v576, %v598
  %v605 = vmul.f32 %v577, %v600
  %v606 = vmul.f32 %v578, %v602
  %v607 = vadd.f32 %v603, %v604
  %v608 = vadd.f32 %v607, %v605
  %v609 = vadd.f32 %v608, %v606
  %v610 = vrot.slane %v609, 4
  %v611 = vadd.f32 %v609, %v610
  %v612 = vrot.slane %v611, 2
  %v613 = vadd.f32 %v611, %v612
  %v614 = vrot.slane %v613, 1
  %v615 = vadd.f32 %v613, %v614
  %v616 = vmul.f32 %v615, %v203
  %v617 = vmul.f32 %v603, %v603
  %v618 = vmul.f32 %v604, %v604
  %v619 = vmul.f32 %v605, %v605
  %v620 = vmul.f32 %v606, %v606
  %v621 = vadd.f32 %v617, %v618
  %v622 = vadd.f32 %v621, %v619
  %v623 = vadd.f32 %v622, %v620
  %v624 = vrot.slane %v623, 4
  %v625 = vadd.f32 %v623, %v624
  %v626 = vrot.slane %v625, 2
  %v627 = vadd.f32 %v625, %v626
  %v628 = vrot.slane %v627, 1
  %v629 = vadd.f32 %v627, %v628
  %v630 = vmul.f32 %v629, %v203
  %v631 = vmul.f32 %v616, %v616
  %v632 = vsub.f32 %v630, %v631
  %v633 = vsub.f32 %v603, %v616
  %v634 = vsub.f32 %v604, %v616
  %v635 = vsub.f32 %v605, %v616
  %v636 = vsub.f32 %v606, %v616
  %v637 = vadd.f32 %v632, 0.1
  %v638 = vrsqrt.pop %v637
  %v639 = vmul.f32 %v633, %v638
  %v640 = vmul.f32 %v634, %v638
  %v641 = vmul.f32 %v635, %v638
  %v642 = vmul.f32 %v636, %v638
  %643 = vset.pattern.permute.xlu0 2
  %644 = vperm.xlu0 %643, %v231
  %v645 = vpop.permute.xlu0 %644
  %647 = vset.pattern.permute.xlu0 2
  %648 = vperm.xlu0 %647, %v232
  %v649 = vpop.permute.xlu0 %648
  %651 = vset.pattern.permute.xlu0 2
  %652 = vperm.xlu0 %651, %v233
  %v653 = vpop.permute.xlu0 %652
  %655 = vset.pattern.permute.xlu0 2
  %656 = vperm.xlu0 %655, %v234
  %v657 = vpop.permute.xlu0 %656
  %v659 = vmul.f32 %v639, %v645
  %v660 = vmul.f32 %v640, %v649
  %v661 = vmul.f32 %v641, %v653
  %v662 = vmul.f32 %v642, %v657
  %663 = vset.pattern.permute.xlu0 2
  %664 = vperm.xlu0 %663, %v259
  %v665 = vpop.permute.xlu0 %664
  %667 = vset.pattern.permute.xlu0 2
  %668 = vperm.xlu0 %667, %v260
  %v669 = vpop.permute.xlu0 %668
  %671 = vset.pattern.permute.xlu0 2
  %672 = vperm.xlu0 %671, %v261
  %v673 = vpop.permute.xlu0 %672
  %675 = vset.pattern.permute.xlu0 2
  %676 = vperm.xlu0 %675, %v262
  %v677 = vpop.permute.xlu0 %676
  %v679 = vadd.f32 %v659, %v665
  %v680 = vadd.f32 %v660, %v669
  %v681 = vadd.f32 %v661, %v673
  %v682 = vadd.f32 %v662, %v677
  %v683 = vadd.f32 %v483, %v679
  %v684 = vadd.f32 %v484, %v680
  %v685 = vadd.f32 %v485, %v681
  %v686 = vadd.f32 %v486, %v682
  %s687 = scalar_lea.vmem %s2, 32
  %v688 = vld [vmem:[%s687] sm:$0xf]
  %v689 = vld [vmem:[%s687 + $0x4] sm:$0xf]
  %v690 = vld [vmem:[%s687 + $0x8] sm:$0xf]
  %v691 = vld [vmem:[%s687 + $0xc] sm:$0xf]
  %v692 = vpack.c.bf16 %v680, %v679
  %v693 = vpack.c.bf16 %v682, %v681
  %v698 = vunpack.c.l.b16 %v688
  %v699 = vunpack.c.l.b16 %v689
  %v700 = vunpack.c.l.b16 %v690
  %v701 = vunpack.c.l.b16 %v691
  %v702 = vpack.c.b16 %v699, %v698
  %v703 = vpack.c.b16 %v701, %v700
  %v705 = vsel %vm303, %v702, 0
  %v708 = vsel %vm303, %v703, 0
  %710 = vmatprep.subr.bf16.mxu0 0
  %711 = vmatpush1.bf16.msra.mxu0 %v692
  %712 = vmatprep.subr.bf16.mxu0 0
  %713 = vmatpush1.bf16.msra.mxu0 %v693
  %714 = vmatprep.subr.bf16.mxu0 0
  %715 = vmatpush1.bf16.msra.mxu0 0
  %716 = vmatprep.subr.bf16.mxu0 0
  %717 = vmatpush1.bf16.msra.mxu0 0
  %718 = vmatprep.subr.bf16.mxu0 0
  %719 = vmatpush1.bf16.msra.mxu0 0
  %720 = vmatprep.subr.bf16.mxu0 0
  %721 = vmatpush1.bf16.msra.mxu0 0
  %722 = vmatprep.subr.bf16.mxu0 0
  %723 = vmatpush1.bf16.msra.mxu0 0
  %724 = vmatprep.subr.bf16.mxu0 0
  %725 = vmatpush1.bf16.msra.mxu0 0
  %726 = vmatprep.subr.bf16.mxu0 0
  %727 = vmatpush1.bf16.msra.mxu0 0
  %728 = vmatprep.subr.bf16.mxu0 0
  %729 = vmatpush1.bf16.msra.mxu0 0
  %730 = vmatprep.subr.bf16.mxu0 0
  %731 = vmatpush1.bf16.msra.mxu0 0
  %732 = vmatprep.subr.bf16.mxu0 0
  %733 = vmatpush1.bf16.msra.mxu0 0
  %734 = vmatprep.subr.bf16.mxu0 0
  %735 = vmatpush1.bf16.msra.mxu0 0
  %736 = vmatprep.subr.bf16.mxu0 0
  %737 = vmatpush1.bf16.msra.mxu0 0
  %738 = vmatprep.subr.bf16.mxu0 0
  %739 = vmatpush1.bf16.msra.mxu0 0
  %740 = vmatprep.subr.bf16.mxu0 0
  %741 = vmatpush1.bf16.msra.mxu0 0
  %742 = vmatprep.mubr.bf16.mxu0 0
  %743 = vmatmul.mubr.bf16.gmra.mrb[0].mxu0 %v705
  %v744 = vpop.f32.mrb[0].mxu0
  %v745 = vadd.f32 %v683, %v744
  %v746 = vpop.f32.mrb[0].mxu0
  %v747 = vpop.f32.mrb[0].mxu0
  %v748 = vadd.f32 %v684, %v747
  %v749 = vpop.f32.mrb[0].mxu0
  %750 = vmatprep.mubr.bf16.mxu0 0
  %751 = vmatmul.mubr.bf16.gmra.mrb[0].mxu0 %v708
  %v752 = vpop.f32.mrb[0].mxu0
  %v753 = vadd.f32 %v685, %v752
  %v754 = vpop.f32.mrb[0].mxu0
  %v755 = vpop.f32.mrb[0].mxu0
  %v756 = vadd.f32 %v686, %v755
  %v757 = vpop.f32.mrb[0].mxu0
  %758 = vdwg.mxu0
  %759 = vset.pattern.permute.xlu0 3
  %760 = vperm.xlu0 %759, %v76
  %v761 = vpop.permute.xlu0 %760
  %763 = vset.pattern.permute.xlu0 3
  %764 = vperm.xlu0 %763, %v77
  %v765 = vpop.permute.xlu0 %764
  %767 = vset.pattern.permute.xlu0 3
  %768 = vperm.xlu0 %767, %v78
  %v769 = vpop.permute.xlu0 %768
  %771 = vset.pattern.permute.xlu0 3
  %772 = vperm.xlu0 %771, %v79
  %v773 = vpop.permute.xlu0 %772
  %v775 = vadd.f32 %v745, %v761
  %v776 = vadd.f32 %v748, %v765
  %v777 = vadd.f32 %v753, %v769
  %v778 = vadd.f32 %v756, %v773
  %v779 = vxor.u32 %v775, 2147483648
  %v780 = vxor.u32 %v776, 2147483648
  %v781 = vxor.u32 %v777, 2147483648
  %v782 = vxor.u32 %v778, 2147483648
  %v783 = vmul.f32 %v779, 1.442695
  %v784 = vpow.pop %v783
  %v785 = vmul.f32 %v780, 1.442695
  %v786 = vpow.pop %v785
  %v787 = vmul.f32 %v781, 1.442695
  %v788 = vpow.pop %v787
  %v789 = vmul.f32 %v782, 1.442695
  %v790 = vpow.pop %v789
  %v791 = vadd.f32 %v784, 1.0
  %v792 = vadd.f32 %v786, 1.0
  %v793 = vadd.f32 %v788, 1.0
  %v794 = vadd.f32 %v790, 1.0
  %v795 = vrcp.pop %v791
  %v796 = vmul.f32 1.0, %v795
  %v797 = vrcp.pop %v792
  %v798 = vmul.f32 1.0, %v797
  %v799 = vrcp.pop %v793
  %v800 = vmul.f32 1.0, %v799
  %v801 = vrcp.pop %v794
  %v802 = vmul.f32 1.0, %v801
  %v803 = vmul.f32 %v775, %v796
  %v804 = vmul.f32 %v776, %v798
  %v805 = vmul.f32 %v777, %v800
  %v806 = vmul.f32 %v778, %v802
  %v807 = vadd.f32 %v803, %v804
  %v808 = vadd.f32 %v807, %v805
  %v809 = vadd.f32 %v808, %v806
  %v810 = vrot.slane %v809, 4
  %v811 = vadd.f32 %v809, %v810
  %v812 = vrot.slane %v811, 2
  %v813 = vadd.f32 %v811, %v812
  %v814 = vrot.slane %v813, 1
  %v815 = vadd.f32 %v813, %v814
  %v816 = vmul.f32 %v815, %v203
  %v817 = vmul.f32 %v803, %v803
  %v818 = vmul.f32 %v804, %v804
  %v819 = vmul.f32 %v805, %v805
  %v820 = vmul.f32 %v806, %v806
  %v821 = vadd.f32 %v817, %v818
  %v822 = vadd.f32 %v821, %v819
  %v823 = vadd.f32 %v822, %v820
  %v824 = vrot.slane %v823, 4
  %v825 = vadd.f32 %v823, %v824
  %v826 = vrot.slane %v825, 2
  %v827 = vadd.f32 %v825, %v826
  %v828 = vrot.slane %v827, 1
  %v829 = vadd.f32 %v827, %v828
  %v830 = vmul.f32 %v829, %v203
  %v831 = vmul.f32 %v816, %v816
  %v832 = vsub.f32 %v830, %v831
  %v833 = vsub.f32 %v803, %v816
  %v834 = vsub.f32 %v804, %v816
  %v835 = vsub.f32 %v805, %v816
  %v836 = vsub.f32 %v806, %v816
  %v837 = vadd.f32 %v832, 0.1
  %v838 = vrsqrt.pop %v837
  %v839 = vmul.f32 %v833, %v838
  %v840 = vmul.f32 %v834, %v838
  %v841 = vmul.f32 %v835, %v838
  %v842 = vmul.f32 %v836, %v838
  %843 = vset.pattern.permute.xlu0 3
  %844 = vperm.xlu0 %843, %v231
  %v845 = vpop.permute.xlu0 %844
  %847 = vset.pattern.permute.xlu0 3
  %848 = vperm.xlu0 %847, %v232
  %v849 = vpop.permute.xlu0 %848
  %851 = vset.pattern.permute.xlu0 3
  %852 = vperm.xlu0 %851, %v233
  %v853 = vpop.permute.xlu0 %852
  %855 = vset.pattern.permute.xlu0 3
  %856 = vperm.xlu0 %855, %v234
  %v857 = vpop.permute.xlu0 %856
  %v859 = vmul.f32 %v839, %v845
  %v860 = vmul.f32 %v840, %v849
  %v861 = vmul.f32 %v841, %v853
  %v862 = vmul.f32 %v842, %v857
  %863 = vset.pattern.permute.xlu0 3
  %864 = vperm.xlu0 %863, %v259
  %v865 = vpop.permute.xlu0 %864
  %867 = vset.pattern.permute.xlu0 3
  %868 = vperm.xlu0 %867, %v260
  %v869 = vpop.permute.xlu0 %868
  %871 = vset.pattern.permute.xlu0 3
  %872 = vperm.xlu0 %871, %v261
  %v873 = vpop.permute.xlu0 %872
  %875 = vset.pattern.permute.xlu0 3
  %876 = vperm.xlu0 %875, %v262
  %v877 = vpop.permute.xlu0 %876
  %v879 = vadd.f32 %v859, %v865
  %v880 = vadd.f32 %v860, %v869
  %v881 = vadd.f32 %v861, %v873
  %v882 = vadd.f32 %v862, %v877
  %v883 = vadd.f32 %v683, %v879
  %v884 = vadd.f32 %v684, %v880
  %v885 = vadd.f32 %v685, %v881
  %v886 = vadd.f32 %v686, %v882
  %s887 = scalar_lea.vmem %s2, 48
  %v888 = vld [vmem:[%s887] sm:$0xf]
  %v889 = vld [vmem:[%s887 + $0x4] sm:$0xf]
  %v890 = vld [vmem:[%s887 + $0x8] sm:$0xf]
  %v891 = vld [vmem:[%s887 + $0xc] sm:$0xf]
  %v892 = vpack.c.bf16 %v880, %v879
  %v893 = vpack.c.bf16 %v882, %v881
  %v898 = vunpack.c.l.b16 %v888
  %v899 = vunpack.c.l.b16 %v889
  %v900 = vunpack.c.l.b16 %v890
  %v901 = vunpack.c.l.b16 %v891
  %v902 = vpack.c.b16 %v899, %v898
  %v903 = vpack.c.b16 %v901, %v900
  %v905 = vsel %vm303, %v902, 0
  %v908 = vsel %vm303, %v903, 0
  %910 = vmatprep.subr.bf16.mxu0 0
  %911 = vmatpush1.bf16.msra.mxu0 %v892
  %912 = vmatprep.subr.bf16.mxu0 0
  %913 = vmatpush1.bf16.msra.mxu0 %v893
  %914 = vmatprep.subr.bf16.mxu0 0
  %915 = vmatpush1.bf16.msra.mxu0 0
  %916 = vmatprep.subr.bf16.mxu0 0
  %917 = vmatpush1.bf16.msra.mxu0 0
  %918 = vmatprep.subr.bf16.mxu0 0
  %919 = vmatpush1.bf16.msra.mxu0 0
  %920 = vmatprep.subr.bf16.mxu0 0
  %921 = vmatpush1.bf16.msra.mxu0 0
  %922 = vmatprep.subr.bf16.mxu0 0
  %923 = vmatpush1.bf16.msra.mxu0 0
  %924 = vmatprep.subr.bf16.mxu0 0
  %925 = vmatpush1.bf16.msra.mxu0 0
  %926 = vmatprep.subr.bf16.mxu0 0
  %927 = vmatpush1.bf16.msra.mxu0 0
  %928 = vmatprep.subr.bf16.mxu0 0
  %929 = vmatpush1.bf16.msra.mxu0 0
  %930 = vmatprep.subr.bf16.mxu0 0
  %931 = vmatpush1.bf16.msra.mxu0 0
  %932 = vmatprep.subr.bf16.mxu0 0
  %933 = vmatpush1.bf16.msra.mxu0 0
  %934 = vmatprep.subr.bf16.mxu0 0
  %935 = vmatpush1.bf16.msra.mxu0 0
  %936 = vmatprep.subr.bf16.mxu0 0
  %937 = vmatpush1.bf16.msra.mxu0 0
  %938 = vmatprep.subr.bf16.mxu0 0
  %939 = vmatpush1.bf16.msra.mxu0 0
  %940 = vmatprep.subr.bf16.mxu0 0
  %941 = vmatpush1.bf16.msra.mxu0 0
  %942 = vmatprep.mubr.bf16.mxu0 0
  %943 = vmatmul.mubr.bf16.gmra.mrb[0].mxu0 %v905
  %v944 = vpop.f32.mrb[0].mxu0
  %v945 = vadd.f32 %v883, %v944
  %v946 = vpop.f32.mrb[0].mxu0
  %v947 = vpop.f32.mrb[0].mxu0
  %v948 = vadd.f32 %v884, %v947
  %v949 = vpop.f32.mrb[0].mxu0
  %950 = vmatprep.mubr.bf16.mxu0 0
  %951 = vmatmul.mubr.bf16.gmra.mrb[0].mxu0 %v908
  %v952 = vpop.f32.mrb[0].mxu0
  %v953 = vadd.f32 %v885, %v952
  %v954 = vpop.f32.mrb[0].mxu0
  %v955 = vpop.f32.mrb[0].mxu0
  %v956 = vadd.f32 %v886, %v955
  %v957 = vpop.f32.mrb[0].mxu0
  %958 = vdwg.mxu0
  %959 = vset.pattern.permute.xlu0 4
  %960 = vperm.xlu0 %959, %v76
  %v961 = vpop.permute.xlu0 %960
  %963 = vset.pattern.permute.xlu0 4
  %964 = vperm.xlu0 %963, %v77
  %v965 = vpop.permute.xlu0 %964
  %967 = vset.pattern.permute.xlu0 4
  %968 = vperm.xlu0 %967, %v78
  %v969 = vpop.permute.xlu0 %968
  %971 = vset.pattern.permute.xlu0 4
  %972 = vperm.xlu0 %971, %v79
  %v973 = vpop.permute.xlu0 %972
  %v975 = vadd.f32 %v945, %v961
  %v976 = vadd.f32 %v948, %v965
  %v977 = vadd.f32 %v953, %v969
  %v978 = vadd.f32 %v956, %v973
  %v979 = vxor.u32 %v975, 2147483648
  %v980 = vxor.u32 %v976, 2147483648
  %v981 = vxor.u32 %v977, 2147483648
  %v982 = vxor.u32 %v978, 2147483648
  %v983 = vmul.f32 %v979, 1.442695
  %v984 = vpow.pop %v983
  %v985 = vmul.f32 %v980, 1.442695
  %v986 = vpow.pop %v985
  %v987 = vmul.f32 %v981, 1.442695
  %v988 = vpow.pop %v987
  %v989 = vmul.f32 %v982, 1.442695
  %v990 = vpow.pop %v989
  %v991 = vadd.f32 %v984, 1.0
  %v992 = vadd.f32 %v986, 1.0
  %v993 = vadd.f32 %v988, 1.0
  %v994 = vadd.f32 %v990, 1.0
  %v995 = vrcp.pop %v991
  %v996 = vmul.f32 1.0, %v995
  %v997 = vrcp.pop %v992
  %v998 = vmul.f32 1.0, %v997
  %v999 = vrcp.pop %v993
  %v1000 = vmul.f32 1.0, %v999
  %v1001 = vrcp.pop %v994
  %v1002 = vmul.f32 1.0, %v1001
  %v1003 = vmul.f32 %v975, %v996
  %v1004 = vmul.f32 %v976, %v998
  %v1005 = vmul.f32 %v977, %v1000
  %v1006 = vmul.f32 %v978, %v1002
  %v1007 = vadd.f32 %v1003, %v1004
  %v1008 = vadd.f32 %v1007, %v1005
  %v1009 = vadd.f32 %v1008, %v1006
  %v1010 = vrot.slane %v1009, 4
  %v1011 = vadd.f32 %v1009, %v1010
  %v1012 = vrot.slane %v1011, 2
  %v1013 = vadd.f32 %v1011, %v1012
  %v1014 = vrot.slane %v1013, 1
  %v1015 = vadd.f32 %v1013, %v1014
  %v1016 = vmul.f32 %v1015, %v203
  %v1017 = vmul.f32 %v1003, %v1003
  %v1018 = vmul.f32 %v1004, %v1004
  %v1019 = vmul.f32 %v1005, %v1005
  %v1020 = vmul.f32 %v1006, %v1006
  %v1021 = vadd.f32 %v1017, %v1018
  %v1022 = vadd.f32 %v1021, %v1019
  %v1023 = vadd.f32 %v1022, %v1020
  %v1024 = vrot.slane %v1023, 4
  %v1025 = vadd.f32 %v1023, %v1024
  %v1026 = vrot.slane %v1025, 2
  %v1027 = vadd.f32 %v1025, %v1026
  %v1028 = vrot.slane %v1027, 1
  %v1029 = vadd.f32 %v1027, %v1028
  %v1030 = vmul.f32 %v1029, %v203
  %v1031 = vmul.f32 %v1016, %v1016
  %v1032 = vsub.f32 %v1030, %v1031
  %v1033 = vsub.f32 %v1003, %v1016
  %v1034 = vsub.f32 %v1004, %v1016
  %v1035 = vsub.f32 %v1005, %v1016
  %v1036 = vsub.f32 %v1006, %v1016
  %v1037 = vadd.f32 %v1032, 0.1
  %v1038 = vrsqrt.pop %v1037
  %v1039 = vmul.f32 %v1033, %v1038
  %v1040 = vmul.f32 %v1034, %v1038
  %v1041 = vmul.f32 %v1035, %v1038
  %v1042 = vmul.f32 %v1036, %v1038
  %1043 = vset.pattern.permute.xlu0 4
  %1044 = vperm.xlu0 %1043, %v231
  %v1045 = vpop.permute.xlu0 %1044
  %1047 = vset.pattern.permute.xlu0 4
  %1048 = vperm.xlu0 %1047, %v232
  %v1049 = vpop.permute.xlu0 %1048
  %1051 = vset.pattern.permute.xlu0 4
  %1052 = vperm.xlu0 %1051, %v233
  %v1053 = vpop.permute.xlu0 %1052
  %1055 = vset.pattern.permute.xlu0 4
  %1056 = vperm.xlu0 %1055, %v234
  %v1057 = vpop.permute.xlu0 %1056
  %v1059 = vmul.f32 %v1039, %v1045
  %v1060 = vmul.f32 %v1040, %v1049
  %v1061 = vmul.f32 %v1041, %v1053
  %v1062 = vmul.f32 %v1042, %v1057
  %1063 = vset.pattern.permute.xlu0 4
  %1064 = vperm.xlu0 %1063, %v259
  %v1065 = vpop.permute.xlu0 %1064
  %1067 = vset.pattern.permute.xlu0 4
  %1068 = vperm.xlu0 %1067, %v260
  %v1069 = vpop.permute.xlu0 %1068
  %1071 = vset.pattern.permute.xlu0 4
  %1072 = vperm.xlu0 %1071, %v261
  %v1073 = vpop.permute.xlu0 %1072
  %1075 = vset.pattern.permute.xlu0 4
  %1076 = vperm.xlu0 %1075, %v262
  %v1077 = vpop.permute.xlu0 %1076
  %v1079 = vadd.f32 %v1059, %v1065
  %v1080 = vadd.f32 %v1060, %v1069
  %v1081 = vadd.f32 %v1061, %v1073
  %v1082 = vadd.f32 %v1062, %v1077
  %v1083 = vld [vmem:[%s6] sm:$0xf]
  %v1084 = vld [vmem:[%s6 + $0x4] sm:$0xf]
  %v1085 = vld [vmem:[%s6 + $0x8] sm:$0xf]
  %v1086 = vld [vmem:[%s6 + $0xc] sm:$0xf]
  %v1087 = vpack.c.bf16 %v1080, %v1079
  %v1088 = vpack.c.bf16 %v1082, %v1081
  %v1089 = vld [vmem:[%s7] sm:$0xff]
  %v1090 = vld [vmem:[%s7 + $0x8] sm:$0xff]
  %v1091 = vld [vmem:[%s7 + $0x10] sm:$0xff]
  %v1092 = vld [vmem:[%s7 + $0x18] sm:$0xff]
  %1094 = vset.pattern.permute.xlu0 0
  %1095 = vperm.xlu0 %1094, %v1089
  %v1096 = vpop.permute.xlu0 %1095
  %1099 = vset.pattern.permute.xlu0 0
  %1100 = vperm.xlu0 %1099, %v1090
  %v1101 = vpop.permute.xlu0 %1100
  %1104 = vset.pattern.permute.xlu0 0
  %1105 = vperm.xlu0 %1104, %v1091
  %v1106 = vpop.permute.xlu0 %1105
  %1109 = vset.pattern.permute.xlu0 0
  %1110 = vperm.xlu0 %1109, %v1092
  %v1111 = vpop.permute.xlu0 %1110
  %v1117 = vunpack.c.l.b16 %v1083
  %v1118 = vunpack.c.l.b16 %v1084
  %v1119 = vunpack.c.l.b16 %v1085
  %v1120 = vunpack.c.l.b16 %v1086
  %v1121 = vpack.c.b16 %v1118, %v1117
  %v1122 = vpack.c.b16 %v1120, %v1119
  %v1124 = vsel %vm303, %v1121, 0
  %v1127 = vsel %vm303, %v1122, 0
  %1129 = vmatprep.subr.bf16.mxu0 0
  %1130 = vmatpush1.bf16.msra.mxu0 %v1087
  %1131 = vmatprep.subr.bf16.mxu0 0
  %1132 = vmatpush1.bf16.msra.mxu0 %v1088
  %1133 = vmatprep.subr.bf16.mxu0 0
  %1134 = vmatpush1.bf16.msra.mxu0 0
  %1135 = vmatprep.subr.bf16.mxu0 0
  %1136 = vmatpush1.bf16.msra.mxu0 0
  %1137 = vmatprep.subr.bf16.mxu0 0
  %1138 = vmatpush1.bf16.msra.mxu0 0
  %1139 = vmatprep.subr.bf16.mxu0 0
  %1140 = vmatpush1.bf16.msra.mxu0 0
  %1141 = vmatprep.subr.bf16.mxu0 0
  %1142 = vmatpush1.bf16.msra.mxu0 0
  %1143 = vmatprep.subr.bf16.mxu0 0
  %1144 = vmatpush1.bf16.msra.mxu0 0
  %1145 = vmatprep.subr.bf16.mxu0 0
  %1146 = vmatpush1.bf16.msra.mxu0 0
  %1147 = vmatprep.subr.bf16.mxu0 0
  %1148 = vmatpush1.bf16.msra.mxu0 0
  %1149 = vmatprep.subr.bf16.mxu0 0
  %1150 = vmatpush1.bf16.msra.mxu0 0
  %1151 = vmatprep.subr.bf16.mxu0 0
  %1152 = vmatpush1.bf16.msra.mxu0 0
  %1153 = vmatprep.subr.bf16.mxu0 0
  %1154 = vmatpush1.bf16.msra.mxu0 0
  %1155 = vmatprep.subr.bf16.mxu0 0
  %1156 = vmatpush1.bf16.msra.mxu0 0
  %1157 = vmatprep.subr.bf16.mxu0 0
  %1158 = vmatpush1.bf16.msra.mxu0 0
  %1159 = vmatprep.subr.bf16.mxu0 0
  %1160 = vmatpush1.bf16.msra.mxu0 0
  %1161 = vmatprep.mubr.bf16.mxu0 0
  %1162 = vmatmul.mubr.bf16.gmra.mrb[0].mxu0 %v1124
  %v1163 = vpop.f32.mrb[0].mxu0
  %v1164 = vadd.f32 %v1096, %v1163
  %v1165 = vpop.f32.mrb[0].mxu0
  %v1166 = vpop.f32.mrb[0].mxu0
  %v1167 = vadd.f32 %v1101, %v1166
  %v1168 = vpop.f32.mrb[0].mxu0
  %1169 = vmatprep.mubr.bf16.mxu0 0
  %1170 = vmatmul.mubr.bf16.gmra.mrb[0].mxu0 %v1127
  %v1171 = vpop.f32.mrb[0].mxu0
  %v1172 = vadd.f32 %v1106, %v1171
  %v1173 = vpop.f32.mrb[0].mxu0
  %v1174 = vpop.f32.mrb[0].mxu0
  %v1175 = vadd.f32 %v1111, %v1174
  %v1176 = vpop.f32.mrb[0].mxu0
  %1177 = vdwg.mxu0
  %1178 = vst [vmem:[%s8] sm:$0xff] %v1164
  %1179 = vst [vmem:[%s8 + $0x8] sm:$0xff] %v1167
  %1180 = vst [vmem:[%s8 + $0x10] sm:$0xff] %v1172
  %1181 = vst [vmem:[%s8 + $0x18] sm:$0xff] %v1175
  // Predicated region
  $region34: #{encoder_forward.1} parent=0 // pred_check
    _
  $region35: #{encoder_forward.1} parent=0 // pred_check_branch
    %1183 = sbr.rel (0) target = $region37
  $region36: #{encoder_forward.1} parent=0 // pred_region
    _
  $region37: #{encoder_forward.1} parent=0 // pred_fallthru
    _
  // Predicated region
  $region38: #{encoder_forward.1} parent=0 // pred_check
    _
  $region39: #{encoder_forward.1} parent=0 // pred_check_branch
    %1185 = sbr.rel (0) target = $region41
  $region40: #{encoder_forward.1} parent=0 // pred_region
    _
  $region41: #{encoder_forward.1} parent=0 // pred_fallthru
    _

</llo_original>
